<compile_context>
chip_gen: v6e
topology: v6e:2x2x1
jax: 0.10.0
libtpu: 0.0.40
codegen_flags: <defaults>
</compile_context>

<pallas_src>
import functools

import jax
import jax.numpy as jnp
from jax import lax
from jax.experimental import pallas as pl
from jax.experimental.pallas import tpu as pltpu


# ---------------------------------------------------------------------------
# Fused forward kernel
# ---------------------------------------------------------------------------

def _composite_kernel(im_ref, wconv_ref, cbias_ref, w5_ref, ebias_ref,
                      wheads_ref, bheads_ref, qw2_ref, qb2_ref,
                      ind_ref, indt_ref,
                      q_ref, dist_ref, *, B, H, QH):
    """Whole CompositeModel forward on VMEM-resident tiles.

    im_ref    : (H*B, 9*W*C)  bf16  im2col patches, rows ordered (h, b), lanes (tap, w, c)
    wconv_ref : (9*W*C, W*OC) bf16  stacked block-diagonal-over-w conv weights
    cbias_ref : (1, W*OC)     f32   conv bias tiled over the (w, oc) lane axis
    w5_ref    : (H*W*OC, E)   bf16  emb weight, rows pre-permuted to (h, w, oc)
    wheads_ref: (E, 384)      bf16  [q_w1 | 0-pad | dist_w | 0-pad]   (lane-aligned)
    qw2_ref   : (QH, 128)     bf16  q_w2 padded to 128 output lanes
    ind_ref   : (256, A) f32 / indt_ref : (A, 256) f32  per-action indicator matrices
    outputs   : q (B, 128) f32, dist (B, 256) f32   (lane-dense, sliced in the wrapper)
    """
    # ---- Conv2d(3x3, pad=1) + bias + ReLU: ONE MXU matmul, K = 9*W*C = 576. ----
    conv = jnp.dot(im_ref[...], wconv_ref[...], preferred_element_type=jnp.float32)
    conv = jnp.maximum(conv + cbias_ref[...], 0.0).astype(jnp.bfloat16)      # (H*B, W*OC)

    # ---- Relayout (h, b)-rows -> (B, H*W*OC): 16 static, 128-lane-aligned blocks. ----
    emb_in = jnp.concatenate([conv[h * B:(h + 1) * B, :] for h in range(H)],
                             axis=-1)                                        # (B, 2048)

    # ---- flatten + Linear(2048 -> E) + ReLU: ONE MXU matmul, K = 2048. ----
    emb = jnp.dot(emb_in, w5_ref[...], preferred_element_type=jnp.float32)
    emb = jnp.maximum(emb + ebias_ref[...], 0.0).astype(jnp.bfloat16)        # (B, E)

    # ---- merged head matmul [q_w1 | dist_w] in one MXU op. ----
    heads = jnp.dot(emb, wheads_ref[...],
                    preferred_element_type=jnp.float32) + bheads_ref[...]    # (B, 384)

    # ---- Q head: ReLU -> Linear(QH -> A); q lanes [0, QH), output padded to 128. ----
    qh = jnp.maximum(heads[:, :QH], 0.0).astype(jnp.bfloat16)                # (B, QH)
    q = jnp.dot(qh, qw2_ref[...], preferred_element_type=jnp.float32) + qb2_ref[...]
    q_ref[...] = q.astype(q_ref.dtype)                                       # (B, 128)

    # ---- Distribution head: per-action softmax via row-global max + indicator matmuls.
    # Padded lanes [A*ATOMS, 256) carry zero logits and zero indicator -> output 0 there.
    logits = heads[:, 128:]                                                  # (B, 256)
    m = jnp.max(logits, axis=-1, keepdims=True)                              # one lane reduce
    e = jnp.exp(logits - m)                                                  # one EUP pass, f32
    s = jnp.dot(e, ind_ref[...], preferred_element_type=jnp.float32)         # (B, A) per-action sums
    invb = jnp.dot(1.0 / s, indt_ref[...],
                   preferred_element_type=jnp.float32)                       # exact recip, broadcast
    dist_ref[...] = (e * invb).astype(dist_ref.dtype)                        # (B, 256)


# ---------------------------------------------------------------------------
# Parameter construction (torch convention) + one-time kernel-layout prep
# ---------------------------------------------------------------------------

def init_params(key, in_ch=4, conv_oc=8, hw=16, emb_dim=32,
                num_actions=4, num_atoms=51, q_hidden=64):
    """Parameters in PyTorch layout (Conv2d OIHW, Linear as (in, out) here)."""
    ks = jax.random.split(key, 10)
    flat = conv_oc * hw * hw
    return {
        "conv_w": jax.random.normal(ks[0], (conv_oc, in_ch, 3, 3), jnp.float32) * 0.1,
        "conv_b": jax.random.normal(ks[1], (conv_oc,), jnp.float32) * 0.01,
        "emb_w": jax.random.normal(ks[2], (flat, emb_dim), jnp.float32) * (1.0 / jnp.sqrt(flat)),
        "emb_b": jax.random.normal(ks[3], (emb_dim,), jnp.float32) * 0.01,
        "dist_w": jax.random.normal(ks[4], (emb_dim, num_actions * num_atoms), jnp.float32) * 0.1,
        "dist_b": jax.random.normal(ks[5], (num_actions * num_atoms,), jnp.float32) * 0.01,
        "q_w1": jax.random.normal(ks[6], (emb_dim, q_hidden), jnp.float32) * 0.1,
        "q_b1": jax.random.normal(ks[7], (q_hidden,), jnp.float32) * 0.01,
        "q_w2": jax.random.normal(ks[8], (q_hidden, num_actions), jnp.float32) * 0.1,
        "q_b2": jax.random.normal(ks[9], (num_actions,), jnp.float32) * 0.01,
    }


def prepare_params(p, *, H, W, num_actions, num_atoms):
    """One-time re-layout + bf16 cast so the fused kernel needs zero runtime transposes."""
    OC, C, KH, KW = p["conv_w"].shape
    E = p["emb_w"].shape[1]
    QH = p["q_w1"].shape[1]
    A = num_actions
    ND = A * num_atoms
    assert ND <= 256 and QH <= 128

    # (a) 3x3 taps -> ONE stacked block-diagonal-over-w weight: (9*W*C, W*OC).
    #     wconv[(tap, w, c), (w', oc)] = conv_w[oc, c, kh, kw] * (w == w')
    base = jnp.transpose(p["conv_w"], (2, 3, 1, 0)).reshape(KH * KW, C, OC)   # (9, C, OC)
    eye_w = jnp.eye(W, dtype=jnp.float32)
    wconv = eye_w[None, :, None, :, None] * base[:, None, :, None, :]         # (9,W,C,W,OC)
    wconv = wconv.reshape(KH * KW * W * C, W * OC).astype(jnp.bfloat16)

    # (b) conv bias broadcast over the (w, oc) lane axis of the conv output.
    cbias = jnp.tile(p["conv_b"], W).reshape(1, W * OC).astype(jnp.float32)

    # (c) emb weight rows permuted from torch's (oc, h, w) flatten order to the
    #     kernel-native (h, w, oc) order -> one (2048, E) contraction matrix.
    w5 = (p["emb_w"].reshape(OC, H, W, E).transpose(1, 2, 0, 3)
          .reshape(H * W * OC, E).astype(jnp.bfloat16))
    ebias = p["emb_b"].reshape(1, E).astype(jnp.float32)

    # (d) merged first-layer head weights, lane-aligned: q_w1 at [0,QH), dist_w at [128,128+ND).
    NHP = 128 + 256
    wheads = jnp.zeros((E, NHP), jnp.float32)
    wheads = wheads.at[:, :QH].set(p["q_w1"]).at[:, 128:128 + ND].set(p["dist_w"])
    bheads = jnp.zeros((1, NHP), jnp.float32)
    bheads = bheads.at[:, :QH].set(p["q_b1"]).at[:, 128:128 + ND].set(p["dist_b"])

    # (e) Q-head second layer padded to 128 output lanes (lane-dense store).
    qw2 = jnp.zeros((QH, 128), jnp.float32).at[:, :A].set(p["q_w2"]).astype(jnp.bfloat16)
    qb2 = jnp.zeros((1, 128), jnp.float32).at[:, :A].set(p["q_b2"])

    # (f) 0/1 indicator matrices: per-action sums (256,A) and reciprocal broadcast (A,256).
    lanes = jnp.arange(256)[:, None]
    acts = jnp.arange(A)[None, :]
    ind = ((lanes >= acts * num_atoms) & (lanes < (acts + 1) * num_atoms)).astype(jnp.float32)

    return {
        "wconv": wconv, "cbias": cbias,
        "w5": w5, "ebias": ebias,
        "wheads": wheads.astype(jnp.bfloat16), "bheads": bheads,
        "qw2": qw2, "qb2": qb2,
        "ind": ind, "indt": ind.T,
    }


# ---------------------------------------------------------------------------
# Forward wrapper
# ---------------------------------------------------------------------------

def _full_block(a):
    """Whole-array BlockSpec for a grid=(1,) call."""
    nd = a.ndim
    return pl.BlockSpec(a.shape, lambda i, _nd=nd: (0,) * _nd)


def composite_forward(prep, x, *, num_actions, num_atoms, for_action=True):
    """Mirrors CompositeModel._forward_without_cuda_graph: (q_estimates, distribution)."""
    del for_action  # synthetic distribution head has no for_action-dependent branch
    B, C, H, W = x.shape
    QH = prep["qw2"].shape[0]
    A, ATOMS = num_actions, num_atoms

    # im2col preprocessing (one tiny fused XLA op on ~70 KiB): NCHW -> NHWC, pad by 1,
    # stack the 9 taps, reorder rows to (h, b) so the conv is a single aligned MXU matmul.
    xh = jnp.transpose(x, (0, 2, 3, 1))                                # (B, H, W, C)
    xp = jnp.pad(xh, ((0, 0), (1, 1), (1, 1), (0, 0)))                 # (B, H+2, W+2, C)
    taps = [xp[:, kh:kh + H, kw:kw + W, :] for kh in range(3) for kw in range(3)]
    pat = jnp.stack(taps, axis=2)                                      # (B, H, 9, W, C)
    im2col = (jnp.transpose(pat, (1, 0, 2, 3, 4))
              .reshape(H * B, 9 * W * C).astype(jnp.bfloat16))         # rows (h, b)

    kern = functools.partial(_composite_kernel, B=B, H=H, QH=QH)

    operands = (im2col, prep["wconv"], prep["cbias"], prep["w5"], prep["ebias"],
                prep["wheads"], prep["bheads"], prep["qw2"], prep["qb2"],
                prep["ind"], prep["indt"])

    q_pad, dist_pad = pl.pallas_call(
        kern,
        out_shape=(jax.ShapeDtypeStruct((B, 128), jnp.float32),
                   jax.ShapeDtypeStruct((B, 256), jnp.float32)),
        grid=(1,),
        in_specs=[_full_block(a) for a in operands],
        out_specs=(
            pl.BlockSpec((B, 128), lambda i: (0, 0)),
            pl.BlockSpec((B, 256), lambda i: (0, 0)),
        ),
        # Single step: B=2 is latency-bound.  For real batches, make batch a leading
        # "parallel" grid axis (batch-blocked specs) so v7x's second TensorCore is used.
        compiler_params=pltpu.CompilerParams(dimension_semantics=("arbitrary",)),
    )(*operands)

    # Slice away the lane padding (free metadata ops).
    q = q_pad[:, :A]
    dist = dist_pad[:, :A * ATOMS].reshape(B, A, ATOMS)
    return q, dist


# ---------------------------------------------------------------------------
# Pure-JAX f32 reference (torch-convention weights) for a loose numerical check
# ---------------------------------------------------------------------------

def reference_forward(params, x, num_actions, num_atoms):
    B = x.shape[0]
    y = lax.conv_general_dilated(x, params["conv_w"], (1, 1), "SAME",
                                 dimension_numbers=("NCHW", "OIHW", "NCHW"))
    y = jnp.maximum(y + params["conv_b"][None, :, None, None], 0.0)
    f = y.reshape(B, -1)                                            # torch .flatten(1) order
    emb = jnp.maximum(f @ params["emb_w"] + params["emb_b"], 0.0)
    logits = emb @ params["dist_w"] + params["dist_b"]
    dist = jax.nn.softmax(logits.reshape(B, num_actions, num_atoms), axis=-1)
    h = jnp.maximum(emb @ params["q_w1"] + params["q_b1"], 0.0)
    q = h @ params["q_w2"] + params["q_b2"]
    return q, dist


if __name__ == "__main__":
    key = jax.random.PRNGKey(0)
    pkey, xkey = jax.random.split(key)

    B, C, H, W = 2, 4, 16, 16
    NUM_ACTIONS, NUM_ATOMS = 4, 51

    params = init_params(pkey, in_ch=C, conv_oc=8, hw=H, emb_dim=32,
                         num_actions=NUM_ACTIONS, num_atoms=NUM_ATOMS, q_hidden=64)
    prep = prepare_params(params, H=H, W=W,
                          num_actions=NUM_ACTIONS, num_atoms=NUM_ATOMS)
    x = jax.random.normal(xkey, (B, C, H, W), jnp.float32)

    fwd = jax.jit(functools.partial(composite_forward,
                                    num_actions=NUM_ACTIONS, num_atoms=NUM_ATOMS))
    q_est, dist_est = fwd(prep, x)
    jax.block_until_ready((q_est, dist_est))

    # Shape + sanity checks.
    assert q_est.shape == (B, NUM_ACTIONS)
    assert dist_est.shape == (B, NUM_ACTIONS, NUM_ATOMS)
    assert bool(jnp.all(jnp.isfinite(q_est))) and bool(jnp.all(jnp.isfinite(dist_est)))
    # Exact (f32) normalization -> rows sum to 1 tightly.
    assert jnp.allclose(jnp.sum(dist_est, axis=-1), 1.0, atol=1e-3)
    # Loose comparison vs. the f32 reference (kernel uses bf16 MXU inputs).
    q_ref, dist_ref = reference_forward(params, x, NUM_ACTIONS, NUM_ATOMS)
    assert jnp.allclose(q_est, q_ref, atol=1e-2, rtol=5e-2)
    assert jnp.allclose(dist_est, dist_ref, atol=1e-2, rtol=5e-2)

    print("KERNEL_OK")
</pallas_src>

<mosaic_0001>
module attributes {stable_mosaic.version = 11 : i64} {
  func.func @_composite_kernel(%arg0: i32, %arg1: memref<32x576xbf16, #tpu.memory_space<vmem>>, %arg2: memref<576x128xbf16, #tpu.memory_space<vmem>>, %arg3: memref<1x128xf32, #tpu.memory_space<vmem>>, %arg4: memref<2048x32xbf16, #tpu.memory_space<vmem>>, %arg5: memref<1x32xf32, #tpu.memory_space<vmem>>, %arg6: memref<32x384xbf16, #tpu.memory_space<vmem>>, %arg7: memref<1x384xf32, #tpu.memory_space<vmem>>, %arg8: memref<64x128xbf16, #tpu.memory_space<vmem>>, %arg9: memref<1x128xf32, #tpu.memory_space<vmem>>, %arg10: memref<256x4xf32, #tpu.memory_space<vmem>>, %arg11: memref<4x256xf32, #tpu.memory_space<vmem>>, %arg12: memref<2x128xf32, #tpu.memory_space<vmem>>, %arg13: memref<2x256xf32, #tpu.memory_space<vmem>>) attributes {dimension_semantics = [#tpu.dimension_semantics<arbitrary>], iteration_bounds = array<i64: 1>, scalar_prefetch = 0 : i64, scratch_operands = 0 : i64, tpu.core_type = #tpu.core_type<tc>, window_params = [{pipeline_mode = #tpu.pipeline_mode<synchronous>, transform_indices = @transform_0, window_bounds = array<i64: 32, 576>}, {pipeline_mode = #tpu.pipeline_mode<synchronous>, transform_indices = @transform_1, window_bounds = array<i64: 576, 128>}, {pipeline_mode = #tpu.pipeline_mode<synchronous>, transform_indices = @transform_2, window_bounds = array<i64: 1, 128>}, {pipeline_mode = #tpu.pipeline_mode<synchronous>, transform_indices = @transform_3, window_bounds = array<i64: 2048, 32>}, {pipeline_mode = #tpu.pipeline_mode<synchronous>, transform_indices = @transform_4, window_bounds = array<i64: 1, 32>}, {pipeline_mode = #tpu.pipeline_mode<synchronous>, transform_indices = @transform_5, window_bounds = array<i64: 32, 384>}, {pipeline_mode = #tpu.pipeline_mode<synchronous>, transform_indices = @transform_6, window_bounds = array<i64: 1, 384>}, {pipeline_mode = #tpu.pipeline_mode<synchronous>, transform_indices = @transform_7, window_bounds = array<i64: 64, 128>}, {pipeline_mode = #tpu.pipeline_mode<synchronous>, transform_indices = @transform_8, window_bounds = array<i64: 1, 128>}, {pipeline_mode = #tpu.pipeline_mode<synchronous>, transform_indices = @transform_9, window_bounds = array<i64: 256, 4>}, {pipeline_mode = #tpu.pipeline_mode<synchronous>, transform_indices = @transform_10, window_bounds = array<i64: 4, 256>}, {pipeline_mode = #tpu.pipeline_mode<synchronous>, transform_indices = @transform_11, window_bounds = array<i64: 2, 128>}, {pipeline_mode = #tpu.pipeline_mode<synchronous>, transform_indices = @transform_12, window_bounds = array<i64: 2, 256>}]} {
    %c0 = arith.constant 0 : index
    %c0_0 = arith.constant 0 : index
    %0 = vector.load %arg1[%c0, %c0_0] : memref<32x576xbf16, #tpu.memory_space<vmem>>, vector<32x576xbf16>
    %c0_1 = arith.constant 0 : index
    %c0_2 = arith.constant 0 : index
    %1 = vector.load %arg2[%c0_1, %c0_2] : memref<576x128xbf16, #tpu.memory_space<vmem>>, vector<576x128xbf16>
    %cst = arith.constant dense<0.000000e+00> : vector<32x128xf32>
    %2 = tpu.matmul %0, %1, %cst {dimension_numbers = #tpu.dot_dimension_numbers<[1], [0], [0], [1], [0, 0, 1, 1], [], []>} : vector<32x576xbf16>, vector<576x128xbf16>, vector<32x128xf32> -> vector<32x128xf32>
    %c0_3 = arith.constant 0 : index
    %c0_4 = arith.constant 0 : index
    %3 = vector.load %arg3[%c0_3, %c0_4] : memref<1x128xf32, #tpu.memory_space<vmem>>, vector<1x128xf32>
    %4 = vector.broadcast %3 : vector<1x128xf32> to vector<32x128xf32>
    %5 = arith.addf %2, %4 : vector<32x128xf32>
    %cst_5 = arith.constant 0.000000e+00 : f32
    %6 = vector.broadcast %cst_5 : f32 to vector<32x128xf32>
    %7 = arith.maximumf %5, %6 : vector<32x128xf32>
    %8 = arith.truncf %7 : vector<32x128xf32> to vector<32x128xbf16>
    %9 = vector.extract_strided_slice %8 {offsets = [0, 0], sizes = [2, 128], strides = [1, 1]} : vector<32x128xbf16> to vector<2x128xbf16>
    %10 = vector.extract_strided_slice %8 {offsets = [2, 0], sizes = [2, 128], strides = [1, 1]} : vector<32x128xbf16> to vector<2x128xbf16>
    %11 = vector.extract_strided_slice %8 {offsets = [4, 0], sizes = [2, 128], strides = [1, 1]} : vector<32x128xbf16> to vector<2x128xbf16>
    %12 = vector.extract_strided_slice %8 {offsets = [6, 0], sizes = [2, 128], strides = [1, 1]} : vector<32x128xbf16> to vector<2x128xbf16>
    %13 = vector.extract_strided_slice %8 {offsets = [8, 0], sizes = [2, 128], strides = [1, 1]} : vector<32x128xbf16> to vector<2x128xbf16>
    %14 = vector.extract_strided_slice %8 {offsets = [10, 0], sizes = [2, 128], strides = [1, 1]} : vector<32x128xbf16> to vector<2x128xbf16>
    %15 = vector.extract_strided_slice %8 {offsets = [12, 0], sizes = [2, 128], strides = [1, 1]} : vector<32x128xbf16> to vector<2x128xbf16>
    %16 = vector.extract_strided_slice %8 {offsets = [14, 0], sizes = [2, 128], strides = [1, 1]} : vector<32x128xbf16> to vector<2x128xbf16>
    %17 = vector.extract_strided_slice %8 {offsets = [16, 0], sizes = [2, 128], strides = [1, 1]} : vector<32x128xbf16> to vector<2x128xbf16>
    %18 = vector.extract_strided_slice %8 {offsets = [18, 0], sizes = [2, 128], strides = [1, 1]} : vector<32x128xbf16> to vector<2x128xbf16>
    %19 = vector.extract_strided_slice %8 {offsets = [20, 0], sizes = [2, 128], strides = [1, 1]} : vector<32x128xbf16> to vector<2x128xbf16>
    %20 = vector.extract_strided_slice %8 {offsets = [22, 0], sizes = [2, 128], strides = [1, 1]} : vector<32x128xbf16> to vector<2x128xbf16>
    %21 = vector.extract_strided_slice %8 {offsets = [24, 0], sizes = [2, 128], strides = [1, 1]} : vector<32x128xbf16> to vector<2x128xbf16>
    %22 = vector.extract_strided_slice %8 {offsets = [26, 0], sizes = [2, 128], strides = [1, 1]} : vector<32x128xbf16> to vector<2x128xbf16>
    %23 = vector.extract_strided_slice %8 {offsets = [28, 0], sizes = [2, 128], strides = [1, 1]} : vector<32x128xbf16> to vector<2x128xbf16>
    %24 = vector.extract_strided_slice %8 {offsets = [30, 0], sizes = [2, 128], strides = [1, 1]} : vector<32x128xbf16> to vector<2x128xbf16>
    %25 = tpu.concatenate %9, %10, %11, %12, %13, %14, %15, %16, %17, %18, %19, %20, %21, %22, %23, %24 in 1 : vector<2x128xbf16>, vector<2x128xbf16>, vector<2x128xbf16>, vector<2x128xbf16>, vector<2x128xbf16>, vector<2x128xbf16>, vector<2x128xbf16>, vector<2x128xbf16>, vector<2x128xbf16>, vector<2x128xbf16>, vector<2x128xbf16>, vector<2x128xbf16>, vector<2x128xbf16>, vector<2x128xbf16>, vector<2x128xbf16>, vector<2x128xbf16> -> vector<2x2048xbf16>
    %c0_6 = arith.constant 0 : index
    %c0_7 = arith.constant 0 : index
    %26 = vector.load %arg4[%c0_6, %c0_7] : memref<2048x32xbf16, #tpu.memory_space<vmem>>, vector<2048x32xbf16>
    %cst_8 = arith.constant dense<0.000000e+00> : vector<2x32xf32>
    %27 = tpu.matmul %25, %26, %cst_8 {dimension_numbers = #tpu.dot_dimension_numbers<[1], [0], [0], [1], [0, 0, 1, 1], [], []>} : vector<2x2048xbf16>, vector<2048x32xbf16>, vector<2x32xf32> -> vector<2x32xf32>
    %c0_9 = arith.constant 0 : index
    %c0_10 = arith.constant 0 : index
    %28 = vector.load %arg5[%c0_9, %c0_10] : memref<1x32xf32, #tpu.memory_space<vmem>>, vector<1x32xf32>
    %29 = vector.broadcast %28 : vector<1x32xf32> to vector<2x32xf32>
    %30 = arith.addf %27, %29 : vector<2x32xf32>
    %cst_11 = arith.constant 0.000000e+00 : f32
    %31 = vector.broadcast %cst_11 : f32 to vector<2x32xf32>
    %32 = arith.maximumf %30, %31 : vector<2x32xf32>
    %33 = arith.truncf %32 : vector<2x32xf32> to vector<2x32xbf16>
    %c0_12 = arith.constant 0 : index
    %c0_13 = arith.constant 0 : index
    %34 = vector.load %arg6[%c0_12, %c0_13] : memref<32x384xbf16, #tpu.memory_space<vmem>>, vector<32x384xbf16>
    %cst_14 = arith.constant dense<0.000000e+00> : vector<2x384xf32>
    %35 = tpu.matmul %33, %34, %cst_14 {dimension_numbers = #tpu.dot_dimension_numbers<[1], [0], [0], [1], [0, 0, 1, 1], [], []>} : vector<2x32xbf16>, vector<32x384xbf16>, vector<2x384xf32> -> vector<2x384xf32>
    %c0_15 = arith.constant 0 : index
    %c0_16 = arith.constant 0 : index
    %36 = vector.load %arg7[%c0_15, %c0_16] : memref<1x384xf32, #tpu.memory_space<vmem>>, vector<1x384xf32>
    %37 = vector.broadcast %36 : vector<1x384xf32> to vector<2x384xf32>
    %38 = arith.addf %35, %37 : vector<2x384xf32>
    %39 = vector.extract_strided_slice %38 {offsets = [0, 0], sizes = [2, 64], strides = [1, 1]} : vector<2x384xf32> to vector<2x64xf32>
    %cst_17 = arith.constant 0.000000e+00 : f32
    %40 = vector.broadcast %cst_17 : f32 to vector<2x64xf32>
    %41 = arith.maximumf %39, %40 : vector<2x64xf32>
    %42 = arith.truncf %41 : vector<2x64xf32> to vector<2x64xbf16>
    %c0_18 = arith.constant 0 : index
    %c0_19 = arith.constant 0 : index
    %43 = vector.load %arg8[%c0_18, %c0_19] : memref<64x128xbf16, #tpu.memory_space<vmem>>, vector<64x128xbf16>
    %cst_20 = arith.constant dense<0.000000e+00> : vector<2x128xf32>
    %44 = tpu.matmul %42, %43, %cst_20 {dimension_numbers = #tpu.dot_dimension_numbers<[1], [0], [0], [1], [0, 0, 1, 1], [], []>} : vector<2x64xbf16>, vector<64x128xbf16>, vector<2x128xf32> -> vector<2x128xf32>
    %c0_21 = arith.constant 0 : index
    %c0_22 = arith.constant 0 : index
    %45 = vector.load %arg9[%c0_21, %c0_22] : memref<1x128xf32, #tpu.memory_space<vmem>>, vector<1x128xf32>
    %46 = vector.broadcast %45 : vector<1x128xf32> to vector<2x128xf32>
    %47 = arith.addf %44, %46 : vector<2x128xf32>
    %c0_23 = arith.constant 0 : index
    %c0_24 = arith.constant 0 : index
    %48 = vector.load %arg12[%c0_23, %c0_24] : memref<2x128xf32, #tpu.memory_space<vmem>>, vector<2x128xf32>
    tpu.vector_store %arg12[%c0_23, %c0_24], %47 {strides = array<i32>} : memref<2x128xf32, #tpu.memory_space<vmem>>, vector<2x128xf32>,
    %49 = vector.extract_strided_slice %38 {offsets = [0, 128], sizes = [2, 256], strides = [1, 1]} : vector<2x384xf32> to vector<2x256xf32>
    %cst_25 = arith.constant dense<0xFF800000> : vector<2xf32>
    %50 = vector.multi_reduction <maximumf>, %49, %cst_25 [1] : vector<2x256xf32> to vector<2xf32>
    %51 = vector.shape_cast %50 : vector<2xf32> to vector<2x1xf32>
    %52 = vector.broadcast %51 : vector<2x1xf32> to vector<2x256xf32>
    %53 = arith.subf %49, %52 : vector<2x256xf32>
    %54 = math.exp %53 : vector<2x256xf32>
    %c0_26 = arith.constant 0 : index
    %c0_27 = arith.constant 0 : index
    %55 = vector.load %arg10[%c0_26, %c0_27] : memref<256x4xf32, #tpu.memory_space<vmem>>, vector<256x4xf32>
    %cst_28 = arith.constant dense<0.000000e+00> : vector<2x4xf32>
    %56 = tpu.matmul %54, %55, %cst_28 {dimension_numbers = #tpu.dot_dimension_numbers<[1], [0], [0], [1], [0, 0, 1, 1], [], []>} : vector<2x256xf32>, vector<256x4xf32>, vector<2x4xf32> -> vector<2x4xf32>
    %cst_29 = arith.constant 1.000000e+00 : f32
    %57 = vector.broadcast %cst_29 : f32 to vector<2x4xf32>
    %58 = arith.divf %57, %56 : vector<2x4xf32>
    %c0_30 = arith.constant 0 : index
    %c0_31 = arith.constant 0 : index
    %59 = vector.load %arg11[%c0_30, %c0_31] : memref<4x256xf32, #tpu.memory_space<vmem>>, vector<4x256xf32>
    %cst_32 = arith.constant dense<0.000000e+00> : vector<2x256xf32>
    %60 = tpu.matmul %58, %59, %cst_32 {dimension_numbers = #tpu.dot_dimension_numbers<[1], [0], [0], [1], [0, 0, 1, 1], [], []>} : vector<2x4xf32>, vector<4x256xf32>, vector<2x256xf32> -> vector<2x256xf32>
    %61 = arith.mulf %54, %60 : vector<2x256xf32>
    %c0_33 = arith.constant 0 : index
    %c0_34 = arith.constant 0 : index
    %62 = vector.load %arg13[%c0_33, %c0_34] : memref<2x256xf32, #tpu.memory_space<vmem>>, vector<2x256xf32>
    tpu.vector_store %arg13[%c0_33, %c0_34], %61 {strides = array<i32>} : memref<2x256xf32, #tpu.memory_space<vmem>>, vector<2x256xf32>,
    return
  }
  func.func @transform_0(%arg0: i32) -> (i32, i32) {
    %c0_i32 = arith.constant 0 : i32
    %c0_i32_0 = arith.constant 0 : i32
    %c0_i32_1 = arith.constant 0 : i32
    return %c0_i32, %c0_i32_0 : i32, i32
  }
  func.func @transform_1(%arg0: i32) -> (i32, i32) {
    %c0_i32 = arith.constant 0 : i32
    %c0_i32_0 = arith.constant 0 : i32
    %c0_i32_1 = arith.constant 0 : i32
    return %c0_i32, %c0_i32_0 : i32, i32
  }
  func.func @transform_2(%arg0: i32) -> (i32, i32) {
    %c0_i32 = arith.constant 0 : i32
    %c0_i32_0 = arith.constant 0 : i32
    %c0_i32_1 = arith.constant 0 : i32
    return %c0_i32, %c0_i32_0 : i32, i32
  }
  func.func @transform_3(%arg0: i32) -> (i32, i32) {
    %c0_i32 = arith.constant 0 : i32
    %c0_i32_0 = arith.constant 0 : i32
    %c0_i32_1 = arith.constant 0 : i32
    return %c0_i32, %c0_i32_0 : i32, i32
  }
  func.func @transform_4(%arg0: i32) -> (i32, i32) {
    %c0_i32 = arith.constant 0 : i32
    %c0_i32_0 = arith.constant 0 : i32
    %c0_i32_1 = arith.constant 0 : i32
    return %c0_i32, %c0_i32_0 : i32, i32
  }
  func.func @transform_5(%arg0: i32) -> (i32, i32) {
    %c0_i32 = arith.constant 0 : i32
    %c0_i32_0 = arith.constant 0 : i32
    %c0_i32_1 = arith.constant 0 : i32
    return %c0_i32, %c0_i32_0 : i32, i32
  }
  func.func @transform_6(%arg0: i32) -> (i32, i32) {
    %c0_i32 = arith.constant 0 : i32
    %c0_i32_0 = arith.constant 0 : i32
    %c0_i32_1 = arith.constant 0 : i32
    return %c0_i32, %c0_i32_0 : i32, i32
  }
  func.func @transform_7(%arg0: i32) -> (i32, i32) {
    %c0_i32 = arith.constant 0 : i32
    %c0_i32_0 = arith.constant 0 : i32
    %c0_i32_1 = arith.constant 0 : i32
    return %c0_i32, %c0_i32_0 : i32, i32
  }
  func.func @transform_8(%arg0: i32) -> (i32, i32) {
    %c0_i32 = arith.constant 0 : i32
    %c0_i32_0 = arith.constant 0 : i32
    %c0_i32_1 = arith.constant 0 : i32
    return %c0_i32, %c0_i32_0 : i32, i32
  }
  func.func @transform_9(%arg0: i32) -> (i32, i32) {
    %c0_i32 = arith.constant 0 : i32
    %c0_i32_0 = arith.constant 0 : i32
    %c0_i32_1 = arith.constant 0 : i32
    return %c0_i32, %c0_i32_0 : i32, i32
  }
  func.func @transform_10(%arg0: i32) -> (i32, i32) {
    %c0_i32 = arith.constant 0 : i32
    %c0_i32_0 = arith.constant 0 : i32
    %c0_i32_1 = arith.constant 0 : i32
    return %c0_i32, %c0_i32_0 : i32, i32
  }
  func.func @transform_11(%arg0: i32) -> (i32, i32) {
    %c0_i32 = arith.constant 0 : i32
    %c0_i32_0 = arith.constant 0 : i32
    %c0_i32_1 = arith.constant 0 : i32
    return %c0_i32, %c0_i32_0 : i32, i32
  }
  func.func @transform_12(%arg0: i32) -> (i32, i32) {
    %c0_i32 = arith.constant 0 : i32
    %c0_i32_0 = arith.constant 0 : i32
    %c0_i32_1 = arith.constant 0 : i32
    return %c0_i32, %c0_i32_0 : i32, i32
  }
}

</mosaic_0001>

<llo_original>
// kernel: composite_forward.1
$region0: #{composite_forward.1}
  #allocation0 [shape = 'u32[]', space=smem, size = 0x4, offset = 0x4, fixed_abs, tag = 'smem constant byte address 0x4 - core index']
  #allocation1 [shape = 'u32[144,128]{1,0:T(1,128)}', space=vmem, size = 0x12000, scoped, tag = 'internal scratch']
  %s0 = inlined_call_operand.vmem [shape: bf16[32,576], index: 0, kind: input, shape index: {}]
  %s1 = inlined_call_operand.vmem [shape: bf16[576,128], index: 1, kind: input, shape index: {}]
  %s2 = inlined_call_operand.vmem [shape: f32[1,128], index: 2, kind: input, shape index: {}]
  %s3 = inlined_call_operand.vmem [shape: bf16[2048,32], index: 3, kind: input, shape index: {}]
  %s4 = inlined_call_operand.vmem [shape: f32[1,32], index: 4, kind: input, shape index: {}]
  %s5 = inlined_call_operand.vmem [shape: bf16[32,384], index: 5, kind: input, shape index: {}]
  %s6 = inlined_call_operand.vmem [shape: f32[1,384], index: 6, kind: input, shape index: {}]
  %s7 = inlined_call_operand.vmem [shape: bf16[64,128], index: 7, kind: input, shape index: {}]
  %s8 = inlined_call_operand.vmem [shape: f32[1,128], index: 8, kind: input, shape index: {}]
  %s9 = inlined_call_operand.vmem [shape: f32[256,4], index: 9, kind: input, shape index: {}]
  %s10 = inlined_call_operand.vmem [shape: f32[4,256], index: 10, kind: input, shape index: {}]
  %s11 = inlined_call_operand.hbm [shape: f32[2,128], index: 11, kind: output, shape index: {0}]
  %s12 = inlined_call_operand.vmem [shape: f32[2,256], index: 12, kind: output, shape index: {1}]
  %13 = xla_tuple %s11, %s12
  %s14 = sld [smem:[#allocation0]]
  $region62: #{composite_forward.1} parent=0
    _
  %s16 = ssub.s32 1, %s14
  %s17 = scalar_select 0, %s16, %s14
  $region1: #{composite_forward.1} parent=0
    #allocation2 [shape = 'u8[1024]{0}', space=vmem, size = 0x400, scoped, tag = 'output window, operand 0, single buffered']
    #allocation3 [shape = 's32[1]{0}', space=sflag, size = 0x4, scoped, tag = 'scoped memory for composite_forward.1']
    %18 = vsyncpa [#allocation3], 0
    // Predicated region
    $region2: #{composite_forward.1} parent=1 // pred_check
      _
    $region3: #{composite_forward.1} parent=1 // pred_check_branch
      %20 = sbr.rel (0) target = $region5
    $region4: #{composite_forward.1} parent=1 // pred_region
      _
    $region5: #{composite_forward.1} parent=1 // pred_fallthru
      _
    // Predicated region
    $region6: #{composite_forward.1} parent=1 // pred_check
      _
    $region7: #{composite_forward.1} parent=1 // pred_check_branch
      %22 = sbr.rel (0) target = $region9
    $region8: #{composite_forward.1} parent=1 // pred_region
      _
    $region9: #{composite_forward.1} parent=1 // pred_fallthru
      _
    // Predicated region
    $region10: #{composite_forward.1} parent=1 // pred_check
      _
    $region11: #{composite_forward.1} parent=1 // pred_check_branch
      %24 = sbr.rel (0) target = $region13
    $region12: #{composite_forward.1} parent=1 // pred_region
      _
    $region13: #{composite_forward.1} parent=1 // pred_fallthru
      _
    // Predicated region
    $region14: #{composite_forward.1} parent=1 // pred_check
      _
    $region15: #{composite_forward.1} parent=1 // pred_check_branch
      %26 = sbr.rel (0) target = $region17
    $region16: #{composite_forward.1} parent=1 // pred_region
      _
    $region17: #{composite_forward.1} parent=1 // pred_fallthru
      _
    // Predicated region
    $region18: #{composite_forward.1} parent=1 // pred_check
      _
    $region19: #{composite_forward.1} parent=1 // pred_check_branch
      %28 = sbr.rel (0) target = $region21
    $region20: #{composite_forward.1} parent=1 // pred_region
      _
    $region21: #{composite_forward.1} parent=1 // pred_fallthru
      _
    // Predicated region
    $region22: #{composite_forward.1} parent=1 // pred_check
      _
    $region23: #{composite_forward.1} parent=1 // pred_check_branch
      %30 = sbr.rel (0) target = $region25
    $region24: #{composite_forward.1} parent=1 // pred_region
      _
    $region25: #{composite_forward.1} parent=1 // pred_fallthru
      _
    // Predicated region
    $region26: #{composite_forward.1} parent=1 // pred_check
      _
    $region27: #{composite_forward.1} parent=1 // pred_check_branch
      %32 = sbr.rel (0) target = $region29
    $region28: #{composite_forward.1} parent=1 // pred_region
      _
    $region29: #{composite_forward.1} parent=1 // pred_fallthru
      _
    // Predicated region
    $region30: #{composite_forward.1} parent=1 // pred_check
      _
    $region31: #{composite_forward.1} parent=1 // pred_check_branch
      %34 = sbr.rel (0) target = $region33
    $region32: #{composite_forward.1} parent=1 // pred_region
      _
    $region33: #{composite_forward.1} parent=1 // pred_fallthru
      _
    // Predicated region
    $region34: #{composite_forward.1} parent=1 // pred_check
      _
    $region35: #{composite_forward.1} parent=1 // pred_check_branch
      %36 = sbr.rel (0) target = $region37
    $region36: #{composite_forward.1} parent=1 // pred_region
      _
    $region37: #{composite_forward.1} parent=1 // pred_fallthru
      _
    // Predicated region
    $region38: #{composite_forward.1} parent=1 // pred_check
      _
    $region39: #{composite_forward.1} parent=1 // pred_check_branch
      %38 = sbr.rel (0) target = $region41
    $region40: #{composite_forward.1} parent=1 // pred_region
      _
    $region41: #{composite_forward.1} parent=1 // pred_fallthru
      _
    // Predicated region
    $region42: #{composite_forward.1} parent=1 // pred_check
      _
    $region43: #{composite_forward.1} parent=1 // pred_check_branch
      %40 = sbr.rel (0) target = $region45
    $region44: #{composite_forward.1} parent=1 // pred_region
      _
    $region45: #{composite_forward.1} parent=1 // pred_fallthru
      _
    %v42 = vld [vmem:[%s0] sm:$0xff]
    %v43 = vld [vmem:[%s0 + $0x8] sm:$0xff]
    %v44 = vld [vmem:[%s0 + $0x10] sm:$0xf]
    %v45 = vld [vmem:[%s0 + $0x14] sm:$0xff]
    %v46 = vld [vmem:[%s0 + $0x1c] sm:$0xff]
    %v47 = vld [vmem:[%s0 + $0x24] sm:$0xf]
    %v48 = vld [vmem:[%s0 + $0x28] sm:$0xff]
    %v49 = vld [vmem:[%s0 + $0x30] sm:$0xff]
    %v50 = vld [vmem:[%s0 + $0x38] sm:$0xf]
    %v51 = vld [vmem:[%s0 + $0x3c] sm:$0xff]
    %v52 = vld [vmem:[%s0 + $0x44] sm:$0xff]
    %v53 = vld [vmem:[%s0 + $0x4c] sm:$0xf]
    %v54 = vld [vmem:[%s1] sm:$0xf]
    %v55 = vld [vmem:[%s1 + $0x4] sm:$0xf]
    %v56 = vld [vmem:[%s1 + $0x8] sm:$0xf]
    %v57 = vld [vmem:[%s1 + $0xc] sm:$0xf]
    %v58 = vld [vmem:[%s1 + $0x10] sm:$0xf]
    %v59 = vld [vmem:[%s1 + $0x14] sm:$0xf]
    %v60 = vld [vmem:[%s1 + $0x18] sm:$0xf]
    %v61 = vld [vmem:[%s1 + $0x1c] sm:$0xf]
    %v62 = vld [vmem:[%s1 + $0x20] sm:$0xf]
    %v63 = vld [vmem:[%s1 + $0x24] sm:$0xf]
    %v64 = vld [vmem:[%s1 + $0x28] sm:$0xf]
    %v65 = vld [vmem:[%s1 + $0x2c] sm:$0xf]
    %v66 = vld [vmem:[%s1 + $0x30] sm:$0xf]
    %v67 = vld [vmem:[%s1 + $0x34] sm:$0xf]
    %v68 = vld [vmem:[%s1 + $0x38] sm:$0xf]
    %v69 = vld [vmem:[%s1 + $0x3c] sm:$0xf]
    %v70 = vld [vmem:[%s1 + $0x40] sm:$0xf]
    %v71 = vld [vmem:[%s1 + $0x44] sm:$0xf]
    %v72 = vld [vmem:[%s1 + $0x48] sm:$0xf]
    %v73 = vld [vmem:[%s1 + $0x4c] sm:$0xf]
    %v74 = vld [vmem:[%s1 + $0x50] sm:$0xf]
    %v75 = vld [vmem:[%s1 + $0x54] sm:$0xf]
    %v76 = vld [vmem:[%s1 + $0x58] sm:$0xf]
    %v77 = vld [vmem:[%s1 + $0x5c] sm:$0xf]
    %v78 = vld [vmem:[%s1 + $0x60] sm:$0xf]
    %v79 = vld [vmem:[%s1 + $0x64] sm:$0xf]
    %v80 = vld [vmem:[%s1 + $0x68] sm:$0xf]
    %v81 = vld [vmem:[%s1 + $0x6c] sm:$0xf]
    %v82 = vld [vmem:[%s1 + $0x70] sm:$0xf]
    %v83 = vld [vmem:[%s1 + $0x74] sm:$0xf]
    %v84 = vld [vmem:[%s1 + $0x78] sm:$0xf]
    %v85 = vld [vmem:[%s1 + $0x7c] sm:$0xf]
    %v86 = vld [vmem:[%s1 + $0x80] sm:$0xf]
    %v87 = vld [vmem:[%s1 + $0x84] sm:$0xf]
    %v88 = vld [vmem:[%s1 + $0x88] sm:$0xf]
    %v89 = vld [vmem:[%s1 + $0x8c] sm:$0xf]
    %v90 = vld [vmem:[%s1 + $0x90] sm:$0xf]
    %v91 = vld [vmem:[%s1 + $0x94] sm:$0xf]
    %v92 = vld [vmem:[%s1 + $0x98] sm:$0xf]
    %v93 = vld [vmem:[%s1 + $0x9c] sm:$0xf]
    %v94 = vld [vmem:[%s1 + $0xa0] sm:$0xf]
    %v95 = vld [vmem:[%s1 + $0xa4] sm:$0xf]
    %v96 = vld [vmem:[%s1 + $0xa8] sm:$0xf]
    %v97 = vld [vmem:[%s1 + $0xac] sm:$0xf]
    %v98 = vld [vmem:[%s1 + $0xb0] sm:$0xf]
    %v99 = vld [vmem:[%s1 + $0xb4] sm:$0xf]
    %v100 = vld [vmem:[%s1 + $0xb8] sm:$0xf]
    %v101 = vld [vmem:[%s1 + $0xbc] sm:$0xf]
    %v102 = vld [vmem:[%s1 + $0xc0] sm:$0xf]
    %v103 = vld [vmem:[%s1 + $0xc4] sm:$0xf]
    %v104 = vld [vmem:[%s1 + $0xc8] sm:$0xf]
    %v105 = vld [vmem:[%s1 + $0xcc] sm:$0xf]
    %v106 = vld [vmem:[%s1 + $0xd0] sm:$0xf]
    %v107 = vld [vmem:[%s1 + $0xd4] sm:$0xf]
    %v108 = vld [vmem:[%s1 + $0xd8] sm:$0xf]
    %v109 = vld [vmem:[%s1 + $0xdc] sm:$0xf]
    %v110 = vld [vmem:[%s1 + $0xe0] sm:$0xf]
    %v111 = vld [vmem:[%s1 + $0xe4] sm:$0xf]
    %v112 = vld [vmem:[%s1 + $0xe8] sm:$0xf]
    %v113 = vld [vmem:[%s1 + $0xec] sm:$0xf]
    %v114 = vld [vmem:[%s1 + $0xf0] sm:$0xf]
    %v115 = vld [vmem:[%s1 + $0xf4] sm:$0xf]
    %v116 = vld [vmem:[%s1 + $0xf8] sm:$0xf]
    %v117 = vld [vmem:[%s1 + $0xfc] sm:$0xf]
    %v118 = vld [vmem:[%s1 + $0x100] sm:$0xf]
    %v119 = vld [vmem:[%s1 + $0x104] sm:$0xf]
    %v120 = vld [vmem:[%s1 + $0x108] sm:$0xf]
    %v121 = vld [vmem:[%s1 + $0x10c] sm:$0xf]
    %v122 = vld [vmem:[%s1 + $0x110] sm:$0xf]
    %v123 = vld [vmem:[%s1 + $0x114] sm:$0xf]
    %v124 = vld [vmem:[%s1 + $0x118] sm:$0xf]
    %v125 = vld [vmem:[%s1 + $0x11c] sm:$0xf]
    %v126 = vld [vmem:[%s2] sm:$0x1]
    %v128 = vlaneseq
    %v129 = vshrl.u32 %v128, 7
    %v130 = vsub.s32 0, %v129
    %v131 = vrot.slane %v126, %v130
    %v145 = vunpack.c.l.b16 %v42
    %v146 = vunpack.c.h.b16 %v42
    %v147 = vunpack.c.l.b16 %v43
    %v148 = vunpack.c.h.b16 %v43
    %v149 = vunpack.c.l.b16 %v44
    %v150 = vunpack.c.l.b16 %v45
    %v151 = vunpack.c.h.b16 %v45
    %v152 = vunpack.c.l.b16 %v46
    %v153 = vunpack.c.h.b16 %v46
    %v154 = vunpack.c.l.b16 %v47
    %v155 = vunpack.c.l.b16 %v48
    %v156 = vunpack.c.h.b16 %v48
    %v157 = vunpack.c.l.b16 %v49
    %v158 = vunpack.c.h.b16 %v49
    %v159 = vunpack.c.l.b16 %v50
    %v160 = vunpack.c.l.b16 %v51
    %v161 = vunpack.c.h.b16 %v51
    %v162 = vunpack.c.l.b16 %v52
    %v163 = vunpack.c.h.b16 %v52
    %v164 = vunpack.c.l.b16 %v53
    %v165 = vpack.c.b16 %v150, %v145
    %v166 = vpack.c.b16 %v151, %v146
    %v167 = vpack.c.b16 %v152, %v147
    %v168 = vpack.c.b16 %v153, %v148
    %v169 = vpack.c.b16 %v154, %v149
    %v170 = vpack.c.b16 %v160, %v155
    %v171 = vpack.c.b16 %v161, %v156
    %v172 = vpack.c.b16 %v162, %v157
    %v173 = vpack.c.b16 %v163, %v158
    %v174 = vpack.c.b16 %v164, %v159
    %v255 = vunpack.c.l.b16 %v54
    %v256 = vunpack.c.l.b16 %v55
    %v257 = vunpack.c.l.b16 %v56
    %v258 = vunpack.c.l.b16 %v57
    %v259 = vunpack.c.l.b16 %v58
    %v260 = vunpack.c.l.b16 %v59
    %v261 = vunpack.c.l.b16 %v60
    %v262 = vunpack.c.l.b16 %v61
    %v263 = vunpack.c.l.b16 %v62
    %v264 = vunpack.c.l.b16 %v63
    %v265 = vunpack.c.l.b16 %v64
    %v266 = vunpack.c.l.b16 %v65
    %v267 = vunpack.c.l.b16 %v66
    %v268 = vunpack.c.l.b16 %v67
    %v269 = vunpack.c.l.b16 %v68
    %v270 = vunpack.c.l.b16 %v69
    %v271 = vunpack.c.l.b16 %v70
    %v272 = vunpack.c.l.b16 %v71
    %v273 = vunpack.c.l.b16 %v72
    %v274 = vunpack.c.l.b16 %v73
    %v275 = vunpack.c.l.b16 %v74
    %v276 = vunpack.c.l.b16 %v75
    %v277 = vunpack.c.l.b16 %v76
    %v278 = vunpack.c.l.b16 %v77
    %v279 = vunpack.c.l.b16 %v78
    %v280 = vunpack.c.l.b16 %v79
    %v281 = vunpack.c.l.b16 %v80
    %v282 = vunpack.c.l.b16 %v81
    %v283 = vunpack.c.l.b16 %v82
    %v284 = vunpack.c.l.b16 %v83
    %v285 = vunpack.c.l.b16 %v84
    %v286 = vunpack.c.l.b16 %v85
    %v287 = vunpack.c.l.b16 %v86
    %v288 = vunpack.c.l.b16 %v87
    %v289 = vunpack.c.l.b16 %v88
    %v290 = vunpack.c.l.b16 %v89
    %v291 = vunpack.c.l.b16 %v90
    %v292 = vunpack.c.l.b16 %v91
    %v293 = vunpack.c.l.b16 %v92
    %v294 = vunpack.c.l.b16 %v93
    %v295 = vunpack.c.l.b16 %v94
    %v296 = vunpack.c.l.b16 %v95
    %v297 = vunpack.c.l.b16 %v96
    %v298 = vunpack.c.l.b16 %v97
    %v299 = vunpack.c.l.b16 %v98
    %v300 = vunpack.c.l.b16 %v99
    %v301 = vunpack.c.l.b16 %v100
    %v302 = vunpack.c.l.b16 %v101
    %v303 = vunpack.c.l.b16 %v102
    %v304 = vunpack.c.l.b16 %v103
    %v305 = vunpack.c.l.b16 %v104
    %v306 = vunpack.c.l.b16 %v105
    %v307 = vunpack.c.l.b16 %v106
    %v308 = vunpack.c.l.b16 %v107
    %v309 = vunpack.c.l.b16 %v108
    %v310 = vunpack.c.l.b16 %v109
    %v311 = vunpack.c.l.b16 %v110
    %v312 = vunpack.c.l.b16 %v111
    %v313 = vunpack.c.l.b16 %v112
    %v314 = vunpack.c.l.b16 %v113
    %v315 = vunpack.c.l.b16 %v114
    %v316 = vunpack.c.l.b16 %v115
    %v317 = vunpack.c.l.b16 %v116
    %v318 = vunpack.c.l.b16 %v117
    %v319 = vunpack.c.l.b16 %v118
    %v320 = vunpack.c.l.b16 %v119
    %v321 = vunpack.c.l.b16 %v120
    %v322 = vunpack.c.l.b16 %v121
    %v323 = vunpack.c.l.b16 %v122
    %v324 = vunpack.c.l.b16 %v123
    %v325 = vunpack.c.l.b16 %v124
    %v326 = vunpack.c.l.b16 %v125
    %v327 = vpack.c.b16 %v256, %v255
    %v328 = vpack.c.b16 %v258, %v257
    %v329 = vpack.c.b16 %v260, %v259
    %v330 = vpack.c.b16 %v262, %v261
    %v331 = vpack.c.b16 %v264, %v263
    %v332 = vpack.c.b16 %v266, %v265
    %v333 = vpack.c.b16 %v268, %v267
    %v334 = vpack.c.b16 %v270, %v269
    %v335 = vpack.c.b16 %v272, %v271
    %v336 = vpack.c.b16 %v274, %v273
    %v337 = vpack.c.b16 %v276, %v275
    %v338 = vpack.c.b16 %v278, %v277
    %v339 = vpack.c.b16 %v280, %v279
    %v340 = vpack.c.b16 %v282, %v281
    %v341 = vpack.c.b16 %v284, %v283
    %v342 = vpack.c.b16 %v286, %v285
    %v343 = vpack.c.b16 %v288, %v287
    %v344 = vpack.c.b16 %v290, %v289
    %v345 = vpack.c.b16 %v292, %v291
    %v346 = vpack.c.b16 %v294, %v293
    %v347 = vpack.c.b16 %v296, %v295
    %v348 = vpack.c.b16 %v298, %v297
    %v349 = vpack.c.b16 %v300, %v299
    %v350 = vpack.c.b16 %v302, %v301
    %v351 = vpack.c.b16 %v304, %v303
    %v352 = vpack.c.b16 %v306, %v305
    %v353 = vpack.c.b16 %v308, %v307
    %v354 = vpack.c.b16 %v310, %v309
    %v355 = vpack.c.b16 %v312, %v311
    %v356 = vpack.c.b16 %v314, %v313
    %v357 = vpack.c.b16 %v316, %v315
    %v358 = vpack.c.b16 %v318, %v317
    %v359 = vpack.c.b16 %v320, %v319
    %v360 = vpack.c.b16 %v322, %v321
    %v361 = vpack.c.b16 %v324, %v323
    %v362 = vpack.c.b16 %v326, %v325
    %vm399 = vcmask 523264
    %v401 = vsel %vm399, %v169, 0
    %v404 = vsel %vm399, %v174, 0
    %406 = vmatprep.subr.bf16.mxu0 0
    %407 = vmatpush1.bf16.msra.mxu0 %v334
    %408 = vmatprep.subr.bf16.mxu0 0
    %409 = vmatpush1.bf16.msra.mxu0 %v333
    %410 = vmatprep.subr.bf16.mxu0 0
    %411 = vmatpush1.bf16.msra.mxu0 %v332
    %412 = vmatprep.subr.bf16.mxu0 0
    %413 = vmatpush1.bf16.msra.mxu0 %v331
    %414 = vmatprep.subr.bf16.mxu0 0
    %415 = vmatpush1.bf16.msra.mxu0 %v330
    %416 = vmatprep.subr.bf16.mxu0 0
    %417 = vmatpush1.bf16.msra.mxu0 %v329
    %418 = vmatprep.subr.bf16.mxu0 0
    %419 = vmatpush1.bf16.msra.mxu0 %v328
    %420 = vmatprep.subr.bf16.mxu0 0
    %421 = vmatpush1.bf16.msra.mxu0 %v327
    %422 = vmatprep.subr.bf16.mxu0 0
    %423 = vmatpush2.bf16.msra.mxu0 %v342
    %424 = vmatprep.subr.bf16.mxu0 0
    %425 = vmatpush2.bf16.msra.mxu0 %v341
    %426 = vmatprep.subr.bf16.mxu0 0
    %427 = vmatpush2.bf16.msra.mxu0 %v340
    %428 = vmatprep.subr.bf16.mxu0 0
    %429 = vmatpush2.bf16.msra.mxu0 %v339
    %430 = vmatprep.subr.bf16.mxu0 0
    %431 = vmatpush2.bf16.msra.mxu0 %v338
    %432 = vmatprep.subr.bf16.mxu0 0
    %433 = vmatpush2.bf16.msra.mxu0 %v337
    %434 = vmatprep.subr.bf16.mxu0 0
    %435 = vmatpush2.bf16.msra.mxu0 %v336
    %436 = vmatprep.subr.bf16.mxu0 0
    %437 = vmatpush2.bf16.msra.mxu0 %v335
    %438 = vmatprep.mubr.bf16.mxu0 %v166
    %439 = vmatmul.mubr.bf16.gmra.mxu0 %v165
    %v440 = vpop.f32.mrf.mxu0
    %v441 = vadd.f32 %v131, %v440
    %v442 = vpop.f32.mrf.mxu0
    %v443 = vpop.f32.mrf.mxu0
    %v444 = vadd.f32 %v131, %v443
    %v445 = vpop.f32.mrf.mxu0
    %446 = vmatprep.mubr.bf16.mxu0 %v171
    %447 = vmatmul.mubr.bf16.gmra.mxu0 %v170
    %v448 = vpop.f32.mrf.mxu0
    %v449 = vadd.f32 %v131, %v448
    %v450 = vpop.f32.mrf.mxu0
    %v451 = vpop.f32.mrf.mxu0
    %v452 = vadd.f32 %v131, %v451
    %v453 = vpop.f32.mrf.mxu0
    %454 = vdwg.mxu0
    %455 = vmatprep.subr.bf16.mxu0 0
    %456 = vmatpush1.bf16.msra.mxu0 %v350
    %457 = vmatprep.subr.bf16.mxu0 0
    %458 = vmatpush1.bf16.msra.mxu0 %v349
    %459 = vmatprep.subr.bf16.mxu0 0
    %460 = vmatpush1.bf16.msra.mxu0 %v348
    %461 = vmatprep.subr.bf16.mxu0 0
    %462 = vmatpush1.bf16.msra.mxu0 %v347
    %463 = vmatprep.subr.bf16.mxu0 0
    %464 = vmatpush1.bf16.msra.mxu0 %v346
    %465 = vmatprep.subr.bf16.mxu0 0
    %466 = vmatpush1.bf16.msra.mxu0 %v345
    %467 = vmatprep.subr.bf16.mxu0 0
    %468 = vmatpush1.bf16.msra.mxu0 %v344
    %469 = vmatprep.subr.bf16.mxu0 0
    %470 = vmatpush1.bf16.msra.mxu0 %v343
    %471 = vmatprep.subr.bf16.mxu0 0
    %472 = vmatpush2.bf16.msra.mxu0 %v358
    %473 = vmatprep.subr.bf16.mxu0 0
    %474 = vmatpush2.bf16.msra.mxu0 %v357
    %475 = vmatprep.subr.bf16.mxu0 0
    %476 = vmatpush2.bf16.msra.mxu0 %v356
    %477 = vmatprep.subr.bf16.mxu0 0
    %478 = vmatpush2.bf16.msra.mxu0 %v355
    %479 = vmatprep.subr.bf16.mxu0 0
    %480 = vmatpush2.bf16.msra.mxu0 %v354
    %481 = vmatprep.subr.bf16.mxu0 0
    %482 = vmatpush2.bf16.msra.mxu0 %v353
    %483 = vmatprep.subr.bf16.mxu0 0
    %484 = vmatpush2.bf16.msra.mxu0 %v352
    %485 = vmatprep.subr.bf16.mxu0 0
    %486 = vmatpush2.bf16.msra.mxu0 %v351
    %487 = vmatprep.mubr.bf16.mxu0 %v168
    %488 = vmatmul.mubr.bf16.gmra.mxu0 %v167
    %v489 = vpop.f32.mrf.mxu0
    %v490 = vadd.f32 %v441, %v489
    %v491 = vpop.f32.mrf.mxu0
    %v492 = vpop.f32.mrf.mxu0
    %v493 = vadd.f32 %v444, %v492
    %v494 = vpop.f32.mrf.mxu0
    %495 = vmatprep.mubr.bf16.mxu0 %v173
    %496 = vmatmul.mubr.bf16.gmra.mxu0 %v172
    %v497 = vpop.f32.mrf.mxu0
    %v498 = vadd.f32 %v449, %v497
    %v499 = vpop.f32.mrf.mxu0
    %v500 = vpop.f32.mrf.mxu0
    %v501 = vadd.f32 %v452, %v500
    %v502 = vpop.f32.mrf.mxu0
    %503 = vdwg.mxu0
    %504 = vmatprep.subr.bf16.mxu0 0
    %505 = vmatpush1.bf16.msra.mxu0 0
    %506 = vmatprep.subr.bf16.mxu0 0
    %507 = vmatpush1.bf16.msra.mxu0 0
    %508 = vmatprep.subr.bf16.mxu0 0
    %509 = vmatpush1.bf16.msra.mxu0 0
    %510 = vmatprep.subr.bf16.mxu0 0
    %511 = vmatpush1.bf16.msra.mxu0 0
    %512 = vmatprep.subr.bf16.mxu0 0
    %513 = vmatpush1.bf16.msra.mxu0 %v362
    %514 = vmatprep.subr.bf16.mxu0 0
    %515 = vmatpush1.bf16.msra.mxu0 %v361
    %516 = vmatprep.subr.bf16.mxu0 0
    %517 = vmatpush1.bf16.msra.mxu0 %v360
    %518 = vmatprep.subr.bf16.mxu0 0
    %519 = vmatpush1.bf16.msra.mxu0 %v359
    %520 = vmatprep.subr.bf16.mxu0 0
    %521 = vmatpush2.bf16.msra.mxu0 0
    %522 = vmatprep.subr.bf16.mxu0 0
    %523 = vmatpush2.bf16.msra.mxu0 0
    %524 = vmatprep.subr.bf16.mxu0 0
    %525 = vmatpush2.bf16.msra.mxu0 0
    %526 = vmatprep.subr.bf16.mxu0 0
    %527 = vmatpush2.bf16.msra.mxu0 0
    %528 = vmatprep.subr.bf16.mxu0 0
    %529 = vmatpush2.bf16.msra.mxu0 0
    %530 = vmatprep.subr.bf16.mxu0 0
    %531 = vmatpush2.bf16.msra.mxu0 0
    %532 = vmatprep.subr.bf16.mxu0 0
    %533 = vmatpush2.bf16.msra.mxu0 0
    %534 = vmatprep.subr.bf16.mxu0 0
    %535 = vmatpush2.bf16.msra.mxu0 0
    %536 = vmatprep.mubr.bf16.mxu0 0
    %537 = vmatmul.mubr.bf16.gmra.mxu0 %v401
    %v538 = vpop.f32.mrf.mxu0
    %v539 = vadd.f32 %v490, %v538
    %v540 = vpop.f32.mrf.mxu0
    %v541 = vpop.f32.mrf.mxu0
    %v542 = vadd.f32 %v493, %v541
    %v543 = vpop.f32.mrf.mxu0
    %544 = vmatprep.mubr.bf16.mxu0 0
    %545 = vmatmul.mubr.bf16.gmra.mxu0 %v404
    %v546 = vpop.f32.mrf.mxu0
    %v547 = vadd.f32 %v498, %v546
    %v548 = vpop.f32.mrf.mxu0
    %v549 = vpop.f32.mrf.mxu0
    %v550 = vadd.f32 %v501, %v549
    %v551 = vpop.f32.mrf.mxu0
    %552 = vdwg.mxu0
    %v553 = vmax.f32 %v539, 0.0
    %v554 = vmax.f32 %v542, 0.0
    %v555 = vmax.f32 %v547, 0.0
    %v556 = vmax.f32 %v550, 0.0
    %v557 = vpack.c.bf16 %v554, %v553
    %v558 = vpack.c.bf16 %v556, %v555
    %v560 = vrot.slane %v557, 1
    %v562 = vrot.slane %v557, 2
    %v564 = vrot.slane %v557, 3
    %v566 = vrot.slane %v557, 4
    %v568 = vrot.slane %v557, 5
    %v570 = vrot.slane %v557, 6
    %v572 = vrot.slane %v557, 7
    %v575 = vrot.slane %v558, 1
    %v577 = vrot.slane %v558, 2
    %v579 = vrot.slane %v558, 3
    %v581 = vrot.slane %v558, 4
    %v583 = vrot.slane %v558, 5
    %v585 = vrot.slane %v558, 6
    %v587 = vrot.slane %v558, 7
    %v589 = vld [vmem:[%s3] sm:$0xf]
    %v590 = vld [vmem:[%s3 + $0x4] sm:$0xf]
    %v591 = vld [vmem:[%s3 + $0x8] sm:$0xf]
    %v592 = vld [vmem:[%s3 + $0xc] sm:$0xf]
    %v593 = vld [vmem:[%s3 + $0x10] sm:$0xf]
    %v594 = vld [vmem:[%s3 + $0x14] sm:$0xf]
    %v595 = vld [vmem:[%s3 + $0x18] sm:$0xf]
    %v596 = vld [vmem:[%s3 + $0x1c] sm:$0xf]
    %v597 = vld [vmem:[%s3 + $0x20] sm:$0xf]
    %v598 = vld [vmem:[%s3 + $0x24] sm:$0xf]
    %v599 = vld [vmem:[%s3 + $0x28] sm:$0xf]
    %v600 = vld [vmem:[%s3 + $0x2c] sm:$0xf]
    %v601 = vld [vmem:[%s3 + $0x30] sm:$0xf]
    %v602 = vld [vmem:[%s3 + $0x34] sm:$0xf]
    %v603 = vld [vmem:[%s3 + $0x38] sm:$0xf]
    %v604 = vld [vmem:[%s3 + $0x3c] sm:$0xf]
    %v605 = vld [vmem:[%s3 + $0x40] sm:$0xf]
    %v606 = vld [vmem:[%s3 + $0x44] sm:$0xf]
    %v607 = vld [vmem:[%s3 + $0x48] sm:$0xf]
    %v608 = vld [vmem:[%s3 + $0x4c] sm:$0xf]
    %v609 = vld [vmem:[%s3 + $0x50] sm:$0xf]
    %v610 = vld [vmem:[%s3 + $0x54] sm:$0xf]
    %v611 = vld [vmem:[%s3 + $0x58] sm:$0xf]
    %v612 = vld [vmem:[%s3 + $0x5c] sm:$0xf]
    %v613 = vld [vmem:[%s3 + $0x60] sm:$0xf]
    %v614 = vld [vmem:[%s3 + $0x64] sm:$0xf]
    %v615 = vld [vmem:[%s3 + $0x68] sm:$0xf]
    %v616 = vld [vmem:[%s3 + $0x6c] sm:$0xf]
    %v617 = vld [vmem:[%s3 + $0x70] sm:$0xf]
    %v618 = vld [vmem:[%s3 + $0x74] sm:$0xf]
    %v619 = vld [vmem:[%s3 + $0x78] sm:$0xf]
    %v620 = vld [vmem:[%s3 + $0x7c] sm:$0xf]
    %v621 = vld [vmem:[%s3 + $0x80] sm:$0xf]
    %v622 = vld [vmem:[%s3 + $0x84] sm:$0xf]
    %v623 = vld [vmem:[%s3 + $0x88] sm:$0xf]
    %v624 = vld [vmem:[%s3 + $0x8c] sm:$0xf]
    %v625 = vld [vmem:[%s3 + $0x90] sm:$0xf]
    %v626 = vld [vmem:[%s3 + $0x94] sm:$0xf]
    %v627 = vld [vmem:[%s3 + $0x98] sm:$0xf]
    %v628 = vld [vmem:[%s3 + $0x9c] sm:$0xf]
    %v629 = vld [vmem:[%s3 + $0xa0] sm:$0xf]
    %v630 = vld [vmem:[%s3 + $0xa4] sm:$0xf]
    %v631 = vld [vmem:[%s3 + $0xa8] sm:$0xf]
    %v632 = vld [vmem:[%s3 + $0xac] sm:$0xf]
    %v633 = vld [vmem:[%s3 + $0xb0] sm:$0xf]
    %v634 = vld [vmem:[%s3 + $0xb4] sm:$0xf]
    %v635 = vld [vmem:[%s3 + $0xb8] sm:$0xf]
    %v636 = vld [vmem:[%s3 + $0xbc] sm:$0xf]
    %v637 = vld [vmem:[%s3 + $0xc0] sm:$0xf]
    %v638 = vld [vmem:[%s3 + $0xc4] sm:$0xf]
    %v639 = vld [vmem:[%s3 + $0xc8] sm:$0xf]
    %v640 = vld [vmem:[%s3 + $0xcc] sm:$0xf]
    %v641 = vld [vmem:[%s3 + $0xd0] sm:$0xf]
    %v642 = vld [vmem:[%s3 + $0xd4] sm:$0xf]
    %v643 = vld [vmem:[%s3 + $0xd8] sm:$0xf]
    %v644 = vld [vmem:[%s3 + $0xdc] sm:$0xf]
    %v645 = vld [vmem:[%s3 + $0xe0] sm:$0xf]
    %v646 = vld [vmem:[%s3 + $0xe4] sm:$0xf]
    %v647 = vld [vmem:[%s3 + $0xe8] sm:$0xf]
    %v648 = vld [vmem:[%s3 + $0xec] sm:$0xf]
    %v649 = vld [vmem:[%s3 + $0xf0] sm:$0xf]
    %v650 = vld [vmem:[%s3 + $0xf4] sm:$0xf]
    %v651 = vld [vmem:[%s3 + $0xf8] sm:$0xf]
    %v652 = vld [vmem:[%s3 + $0xfc] sm:$0xf]
    %v653 = vld [vmem:[%s3 + $0x100] sm:$0xf]
    %v654 = vld [vmem:[%s3 + $0x104] sm:$0xf]
    %v655 = vld [vmem:[%s3 + $0x108] sm:$0xf]
    %v656 = vld [vmem:[%s3 + $0x10c] sm:$0xf]
    %v657 = vld [vmem:[%s3 + $0x110] sm:$0xf]
    %v658 = vld [vmem:[%s3 + $0x114] sm:$0xf]
    %v659 = vld [vmem:[%s3 + $0x118] sm:$0xf]
    %v660 = vld [vmem:[%s3 + $0x11c] sm:$0xf]
    %v661 = vld [vmem:[%s3 + $0x120] sm:$0xf]
    %v662 = vld [vmem:[%s3 + $0x124] sm:$0xf]
    %v663 = vld [vmem:[%s3 + $0x128] sm:$0xf]
    %v664 = vld [vmem:[%s3 + $0x12c] sm:$0xf]
    %v665 = vld [vmem:[%s3 + $0x130] sm:$0xf]
    %v666 = vld [vmem:[%s3 + $0x134] sm:$0xf]
    %v667 = vld [vmem:[%s3 + $0x138] sm:$0xf]
    %v668 = vld [vmem:[%s3 + $0x13c] sm:$0xf]
    %v669 = vld [vmem:[%s3 + $0x140] sm:$0xf]
    %v670 = vld [vmem:[%s3 + $0x144] sm:$0xf]
    %v671 = vld [vmem:[%s3 + $0x148] sm:$0xf]
    %v672 = vld [vmem:[%s3 + $0x14c] sm:$0xf]
    %v673 = vld [vmem:[%s3 + $0x150] sm:$0xf]
    %v674 = vld [vmem:[%s3 + $0x154] sm:$0xf]
    %v675 = vld [vmem:[%s3 + $0x158] sm:$0xf]
    %v676 = vld [vmem:[%s3 + $0x15c] sm:$0xf]
    %v677 = vld [vmem:[%s3 + $0x160] sm:$0xf]
    %v678 = vld [vmem:[%s3 + $0x164] sm:$0xf]
    %v679 = vld [vmem:[%s3 + $0x168] sm:$0xf]
    %v680 = vld [vmem:[%s3 + $0x16c] sm:$0xf]
    %v681 = vld [vmem:[%s3 + $0x170] sm:$0xf]
    %v682 = vld [vmem:[%s3 + $0x174] sm:$0xf]
    %v683 = vld [vmem:[%s3 + $0x178] sm:$0xf]
    %v684 = vld [vmem:[%s3 + $0x17c] sm:$0xf]
    %v685 = vld [vmem:[%s3 + $0x180] sm:$0xf]
    %v686 = vld [vmem:[%s3 + $0x184] sm:$0xf]
    %v687 = vld [vmem:[%s3 + $0x188] sm:$0xf]
    %v688 = vld [vmem:[%s3 + $0x18c] sm:$0xf]
    %v689 = vld [vmem:[%s3 + $0x190] sm:$0xf]
    %v690 = vld [vmem:[%s3 + $0x194] sm:$0xf]
    %v691 = vld [vmem:[%s3 + $0x198] sm:$0xf]
    %v692 = vld [vmem:[%s3 + $0x19c] sm:$0xf]
    %v693 = vld [vmem:[%s3 + $0x1a0] sm:$0xf]
    %v694 = vld [vmem:[%s3 + $0x1a4] sm:$0xf]
    %v695 = vld [vmem:[%s3 + $0x1a8] sm:$0xf]
    %v696 = vld [vmem:[%s3 + $0x1ac] sm:$0xf]
    %v697 = vld [vmem:[%s3 + $0x1b0] sm:$0xf]
    %v698 = vld [vmem:[%s3 + $0x1b4] sm:$0xf]
    %v699 = vld [vmem:[%s3 + $0x1b8] sm:$0xf]
    %v700 = vld [vmem:[%s3 + $0x1bc] sm:$0xf]
    %v701 = vld [vmem:[%s3 + $0x1c0] sm:$0xf]
    %v702 = vld [vmem:[%s3 + $0x1c4] sm:$0xf]
    %v703 = vld [vmem:[%s3 + $0x1c8] sm:$0xf]
    %v704 = vld [vmem:[%s3 + $0x1cc] sm:$0xf]
    %v705 = vld [vmem:[%s3 + $0x1d0] sm:$0xf]
    %v706 = vld [vmem:[%s3 + $0x1d4] sm:$0xf]
    %v707 = vld [vmem:[%s3 + $0x1d8] sm:$0xf]
    %v708 = vld [vmem:[%s3 + $0x1dc] sm:$0xf]
    %v709 = vld [vmem:[%s3 + $0x1e0] sm:$0xf]
    %v710 = vld [vmem:[%s3 + $0x1e4] sm:$0xf]
    %v711 = vld [vmem:[%s3 + $0x1e8] sm:$0xf]
    %v712 = vld [vmem:[%s3 + $0x1ec] sm:$0xf]
    %v713 = vld [vmem:[%s3 + $0x1f0] sm:$0xf]
    %v714 = vld [vmem:[%s3 + $0x1f4] sm:$0xf]
    %v715 = vld [vmem:[%s3 + $0x1f8] sm:$0xf]
    %v716 = vld [vmem:[%s3 + $0x1fc] sm:$0xf]
    %v717 = vld [vmem:[%s3 + $0x200] sm:$0xf]
    %v718 = vld [vmem:[%s3 + $0x204] sm:$0xf]
    %v719 = vld [vmem:[%s3 + $0x208] sm:$0xf]
    %v720 = vld [vmem:[%s3 + $0x20c] sm:$0xf]
    %v721 = vld [vmem:[%s3 + $0x210] sm:$0xf]
    %v722 = vld [vmem:[%s3 + $0x214] sm:$0xf]
    %v723 = vld [vmem:[%s3 + $0x218] sm:$0xf]
    %v724 = vld [vmem:[%s3 + $0x21c] sm:$0xf]
    %v725 = vld [vmem:[%s3 + $0x220] sm:$0xf]
    %v726 = vld [vmem:[%s3 + $0x224] sm:$0xf]
    %v727 = vld [vmem:[%s3 + $0x228] sm:$0xf]
    %v728 = vld [vmem:[%s3 + $0x22c] sm:$0xf]
    %v729 = vld [vmem:[%s3 + $0x230] sm:$0xf]
    %v730 = vld [vmem:[%s3 + $0x234] sm:$0xf]
    %v731 = vld [vmem:[%s3 + $0x238] sm:$0xf]
    %v732 = vld [vmem:[%s3 + $0x23c] sm:$0xf]
    %v733 = vld [vmem:[%s3 + $0x240] sm:$0xf]
    %v734 = vld [vmem:[%s3 + $0x244] sm:$0xf]
    %v735 = vld [vmem:[%s3 + $0x248] sm:$0xf]
    %v736 = vld [vmem:[%s3 + $0x24c] sm:$0xf]
    %v737 = vld [vmem:[%s3 + $0x250] sm:$0xf]
    %v738 = vld [vmem:[%s3 + $0x254] sm:$0xf]
    %v739 = vld [vmem:[%s3 + $0x258] sm:$0xf]
    %v740 = vld [vmem:[%s3 + $0x25c] sm:$0xf]
    %v741 = vld [vmem:[%s3 + $0x260] sm:$0xf]
    %v742 = vld [vmem:[%s3 + $0x264] sm:$0xf]
    %v743 = vld [vmem:[%s3 + $0x268] sm:$0xf]
    %v744 = vld [vmem:[%s3 + $0x26c] sm:$0xf]
    %v745 = vld [vmem:[%s3 + $0x270] sm:$0xf]
    %v746 = vld [vmem:[%s3 + $0x274] sm:$0xf]
    %v747 = vld [vmem:[%s3 + $0x278] sm:$0xf]
    %v748 = vld [vmem:[%s3 + $0x27c] sm:$0xf]
    %v749 = vld [vmem:[%s3 + $0x280] sm:$0xf]
    %v750 = vld [vmem:[%s3 + $0x284] sm:$0xf]
    %v751 = vld [vmem:[%s3 + $0x288] sm:$0xf]
    %v752 = vld [vmem:[%s3 + $0x28c] sm:$0xf]
    %v753 = vld [vmem:[%s3 + $0x290] sm:$0xf]
    %v754 = vld [vmem:[%s3 + $0x294] sm:$0xf]
    %v755 = vld [vmem:[%s3 + $0x298] sm:$0xf]
    %v756 = vld [vmem:[%s3 + $0x29c] sm:$0xf]
    %v757 = vld [vmem:[%s3 + $0x2a0] sm:$0xf]
    %v758 = vld [vmem:[%s3 + $0x2a4] sm:$0xf]
    %v759 = vld [vmem:[%s3 + $0x2a8] sm:$0xf]
    %v760 = vld [vmem:[%s3 + $0x2ac] sm:$0xf]
    %v761 = vld [vmem:[%s3 + $0x2b0] sm:$0xf]
    %v762 = vld [vmem:[%s3 + $0x2b4] sm:$0xf]
    %v763 = vld [vmem:[%s3 + $0x2b8] sm:$0xf]
    %v764 = vld [vmem:[%s3 + $0x2bc] sm:$0xf]
    %v765 = vld [vmem:[%s3 + $0x2c0] sm:$0xf]
    %v766 = vld [vmem:[%s3 + $0x2c4] sm:$0xf]
    %v767 = vld [vmem:[%s3 + $0x2c8] sm:$0xf]
    %v768 = vld [vmem:[%s3 + $0x2cc] sm:$0xf]
    %v769 = vld [vmem:[%s3 + $0x2d0] sm:$0xf]
    %v770 = vld [vmem:[%s3 + $0x2d4] sm:$0xf]
    %v771 = vld [vmem:[%s3 + $0x2d8] sm:$0xf]
    %v772 = vld [vmem:[%s3 + $0x2dc] sm:$0xf]
    %v773 = vld [vmem:[%s3 + $0x2e0] sm:$0xf]
    %v774 = vld [vmem:[%s3 + $0x2e4] sm:$0xf]
    %v775 = vld [vmem:[%s3 + $0x2e8] sm:$0xf]
    %v776 = vld [vmem:[%s3 + $0x2ec] sm:$0xf]
    %v777 = vld [vmem:[%s3 + $0x2f0] sm:$0xf]
    %v778 = vld [vmem:[%s3 + $0x2f4] sm:$0xf]
    %v779 = vld [vmem:[%s3 + $0x2f8] sm:$0xf]
    %v780 = vld [vmem:[%s3 + $0x2fc] sm:$0xf]
    %v781 = vld [vmem:[%s3 + $0x300] sm:$0xf]
    %v782 = vld [vmem:[%s3 + $0x304] sm:$0xf]
    %v783 = vld [vmem:[%s3 + $0x308] sm:$0xf]
    %v784 = vld [vmem:[%s3 + $0x30c] sm:$0xf]
    %v785 = vld [vmem:[%s3 + $0x310] sm:$0xf]
    %v786 = vld [vmem:[%s3 + $0x314] sm:$0xf]
    %v787 = vld [vmem:[%s3 + $0x318] sm:$0xf]
    %v788 = vld [vmem:[%s3 + $0x31c] sm:$0xf]
    %v789 = vld [vmem:[%s3 + $0x320] sm:$0xf]
    %v790 = vld [vmem:[%s3 + $0x324] sm:$0xf]
    %v791 = vld [vmem:[%s3 + $0x328] sm:$0xf]
    %v792 = vld [vmem:[%s3 + $0x32c] sm:$0xf]
    %v793 = vld [vmem:[%s3 + $0x330] sm:$0xf]
    %v794 = vld [vmem:[%s3 + $0x334] sm:$0xf]
    %v795 = vld [vmem:[%s3 + $0x338] sm:$0xf]
    %v796 = vld [vmem:[%s3 + $0x33c] sm:$0xf]
    %v797 = vld [vmem:[%s3 + $0x340] sm:$0xf]
    %v798 = vld [vmem:[%s3 + $0x344] sm:$0xf]
    %v799 = vld [vmem:[%s3 + $0x348] sm:$0xf]
    %v800 = vld [vmem:[%s3 + $0x34c] sm:$0xf]
    %v801 = vld [vmem:[%s3 + $0x350] sm:$0xf]
    %v802 = vld [vmem:[%s3 + $0x354] sm:$0xf]
    %v803 = vld [vmem:[%s3 + $0x358] sm:$0xf]
    %v804 = vld [vmem:[%s3 + $0x35c] sm:$0xf]
    %v805 = vld [vmem:[%s3 + $0x360] sm:$0xf]
    %v806 = vld [vmem:[%s3 + $0x364] sm:$0xf]
    %v807 = vld [vmem:[%s3 + $0x368] sm:$0xf]
    %v808 = vld [vmem:[%s3 + $0x36c] sm:$0xf]
    %v809 = vld [vmem:[%s3 + $0x370] sm:$0xf]
    %v810 = vld [vmem:[%s3 + $0x374] sm:$0xf]
    %v811 = vld [vmem:[%s3 + $0x378] sm:$0xf]
    %v812 = vld [vmem:[%s3 + $0x37c] sm:$0xf]
    %v813 = vld [vmem:[%s3 + $0x380] sm:$0xf]
    %v814 = vld [vmem:[%s3 + $0x384] sm:$0xf]
    %v815 = vld [vmem:[%s3 + $0x388] sm:$0xf]
    %v816 = vld [vmem:[%s3 + $0x38c] sm:$0xf]
    %v817 = vld [vmem:[%s3 + $0x390] sm:$0xf]
    %v818 = vld [vmem:[%s3 + $0x394] sm:$0xf]
    %v819 = vld [vmem:[%s3 + $0x398] sm:$0xf]
    %v820 = vld [vmem:[%s3 + $0x39c] sm:$0xf]
    %v821 = vld [vmem:[%s3 + $0x3a0] sm:$0xf]
    %v822 = vld [vmem:[%s3 + $0x3a4] sm:$0xf]
    %v823 = vld [vmem:[%s3 + $0x3a8] sm:$0xf]
    %v824 = vld [vmem:[%s3 + $0x3ac] sm:$0xf]
    %v825 = vld [vmem:[%s3 + $0x3b0] sm:$0xf]
    %v826 = vld [vmem:[%s3 + $0x3b4] sm:$0xf]
    %v827 = vld [vmem:[%s3 + $0x3b8] sm:$0xf]
    %v828 = vld [vmem:[%s3 + $0x3bc] sm:$0xf]
    %v829 = vld [vmem:[%s3 + $0x3c0] sm:$0xf]
    %v830 = vld [vmem:[%s3 + $0x3c4] sm:$0xf]
    %v831 = vld [vmem:[%s3 + $0x3c8] sm:$0xf]
    %v832 = vld [vmem:[%s3 + $0x3cc] sm:$0xf]
    %v833 = vld [vmem:[%s3 + $0x3d0] sm:$0xf]
    %v834 = vld [vmem:[%s3 + $0x3d4] sm:$0xf]
    %v835 = vld [vmem:[%s3 + $0x3d8] sm:$0xf]
    %v836 = vld [vmem:[%s3 + $0x3dc] sm:$0xf]
    %v837 = vld [vmem:[%s3 + $0x3e0] sm:$0xf]
    %v838 = vld [vmem:[%s3 + $0x3e4] sm:$0xf]
    %v839 = vld [vmem:[%s3 + $0x3e8] sm:$0xf]
    %v840 = vld [vmem:[%s3 + $0x3ec] sm:$0xf]
    %v841 = vld [vmem:[%s3 + $0x3f0] sm:$0xf]
    %v842 = vld [vmem:[%s3 + $0x3f4] sm:$0xf]
    %v843 = vld [vmem:[%s3 + $0x3f8] sm:$0xf]
    %v844 = vld [vmem:[%s3 + $0x3fc] sm:$0xf]
    %v845 = vld [vmem:[%s4] sm:$0x1]
    %v847 = vlaneseq
    %v848 = vshrl.u32 %v847, 7
    %v849 = vsub.s32 0, %v848
    %v850 = vrot.slane %v845, %v849
    %v1108 = vunpack.c.l.b16 %v589
    %v1109 = vunpack.c.l.b16 %v590
    %v1110 = vunpack.c.l.b16 %v591
    %v1111 = vunpack.c.l.b16 %v592
    %v1112 = vunpack.c.l.b16 %v593
    %v1113 = vunpack.c.l.b16 %v594
    %v1114 = vunpack.c.l.b16 %v595
    %v1115 = vunpack.c.l.b16 %v596
    %v1116 = vunpack.c.l.b16 %v597
    %v1117 = vunpack.c.l.b16 %v598
    %v1118 = vunpack.c.l.b16 %v599
    %v1119 = vunpack.c.l.b16 %v600
    %v1120 = vunpack.c.l.b16 %v601
    %v1121 = vunpack.c.l.b16 %v602
    %v1122 = vunpack.c.l.b16 %v603
    %v1123 = vunpack.c.l.b16 %v604
    %v1124 = vunpack.c.l.b16 %v605
    %v1125 = vunpack.c.l.b16 %v606
    %v1126 = vunpack.c.l.b16 %v607
    %v1127 = vunpack.c.l.b16 %v608
    %v1128 = vunpack.c.l.b16 %v609
    %v1129 = vunpack.c.l.b16 %v610
    %v1130 = vunpack.c.l.b16 %v611
    %v1131 = vunpack.c.l.b16 %v612
    %v1132 = vunpack.c.l.b16 %v613
    %v1133 = vunpack.c.l.b16 %v614
    %v1134 = vunpack.c.l.b16 %v615
    %v1135 = vunpack.c.l.b16 %v616
    %v1136 = vunpack.c.l.b16 %v617
    %v1137 = vunpack.c.l.b16 %v618
    %v1138 = vunpack.c.l.b16 %v619
    %v1139 = vunpack.c.l.b16 %v620
    %v1140 = vunpack.c.l.b16 %v621
    %v1141 = vunpack.c.l.b16 %v622
    %v1142 = vunpack.c.l.b16 %v623
    %v1143 = vunpack.c.l.b16 %v624
    %v1144 = vunpack.c.l.b16 %v625
    %v1145 = vunpack.c.l.b16 %v626
    %v1146 = vunpack.c.l.b16 %v627
    %v1147 = vunpack.c.l.b16 %v628
    %v1148 = vunpack.c.l.b16 %v629
    %v1149 = vunpack.c.l.b16 %v630
    %v1150 = vunpack.c.l.b16 %v631
    %v1151 = vunpack.c.l.b16 %v632
    %v1152 = vunpack.c.l.b16 %v633
    %v1153 = vunpack.c.l.b16 %v634
    %v1154 = vunpack.c.l.b16 %v635
    %v1155 = vunpack.c.l.b16 %v636
    %v1156 = vunpack.c.l.b16 %v637
    %v1157 = vunpack.c.l.b16 %v638
    %v1158 = vunpack.c.l.b16 %v639
    %v1159 = vunpack.c.l.b16 %v640
    %v1160 = vunpack.c.l.b16 %v641
    %v1161 = vunpack.c.l.b16 %v642
    %v1162 = vunpack.c.l.b16 %v643
    %v1163 = vunpack.c.l.b16 %v644
    %v1164 = vunpack.c.l.b16 %v645
    %v1165 = vunpack.c.l.b16 %v646
    %v1166 = vunpack.c.l.b16 %v647
    %v1167 = vunpack.c.l.b16 %v648
    %v1168 = vunpack.c.l.b16 %v649
    %v1169 = vunpack.c.l.b16 %v650
    %v1170 = vunpack.c.l.b16 %v651
    %v1171 = vunpack.c.l.b16 %v652
    %v1172 = vunpack.c.l.b16 %v653
    %v1173 = vunpack.c.l.b16 %v654
    %v1174 = vunpack.c.l.b16 %v655
    %v1175 = vunpack.c.l.b16 %v656
    %v1176 = vunpack.c.l.b16 %v657
    %v1177 = vunpack.c.l.b16 %v658
    %v1178 = vunpack.c.l.b16 %v659
    %v1179 = vunpack.c.l.b16 %v660
    %v1180 = vunpack.c.l.b16 %v661
    %v1181 = vunpack.c.l.b16 %v662
    %v1182 = vunpack.c.l.b16 %v663
    %v1183 = vunpack.c.l.b16 %v664
    %v1184 = vunpack.c.l.b16 %v665
    %v1185 = vunpack.c.l.b16 %v666
    %v1186 = vunpack.c.l.b16 %v667
    %v1187 = vunpack.c.l.b16 %v668
    %v1188 = vunpack.c.l.b16 %v669
    %v1189 = vunpack.c.l.b16 %v670
    %v1190 = vunpack.c.l.b16 %v671
    %v1191 = vunpack.c.l.b16 %v672
    %v1192 = vunpack.c.l.b16 %v673
    %v1193 = vunpack.c.l.b16 %v674
    %v1194 = vunpack.c.l.b16 %v675
    %v1195 = vunpack.c.l.b16 %v676
    %v1196 = vunpack.c.l.b16 %v677
    %v1197 = vunpack.c.l.b16 %v678
    %v1198 = vunpack.c.l.b16 %v679
    %v1199 = vunpack.c.l.b16 %v680
    %v1200 = vunpack.c.l.b16 %v681
    %v1201 = vunpack.c.l.b16 %v682
    %v1202 = vunpack.c.l.b16 %v683
    %v1203 = vunpack.c.l.b16 %v684
    %v1204 = vunpack.c.l.b16 %v685
    %v1205 = vunpack.c.l.b16 %v686
    %v1206 = vunpack.c.l.b16 %v687
    %v1207 = vunpack.c.l.b16 %v688
    %v1208 = vunpack.c.l.b16 %v689
    %v1209 = vunpack.c.l.b16 %v690
    %v1210 = vunpack.c.l.b16 %v691
    %v1211 = vunpack.c.l.b16 %v692
    %v1212 = vunpack.c.l.b16 %v693
    %v1213 = vunpack.c.l.b16 %v694
    %v1214 = vunpack.c.l.b16 %v695
    %v1215 = vunpack.c.l.b16 %v696
    %v1216 = vunpack.c.l.b16 %v697
    %v1217 = vunpack.c.l.b16 %v698
    %v1218 = vunpack.c.l.b16 %v699
    %v1219 = vunpack.c.l.b16 %v700
    %v1220 = vunpack.c.l.b16 %v701
    %v1221 = vunpack.c.l.b16 %v702
    %v1222 = vunpack.c.l.b16 %v703
    %v1223 = vunpack.c.l.b16 %v704
    %v1224 = vunpack.c.l.b16 %v705
    %v1225 = vunpack.c.l.b16 %v706
    %v1226 = vunpack.c.l.b16 %v707
    %v1227 = vunpack.c.l.b16 %v708
    %v1228 = vunpack.c.l.b16 %v709
    %v1229 = vunpack.c.l.b16 %v710
    %v1230 = vunpack.c.l.b16 %v711
    %v1231 = vunpack.c.l.b16 %v712
    %v1232 = vunpack.c.l.b16 %v713
    %v1233 = vunpack.c.l.b16 %v714
    %v1234 = vunpack.c.l.b16 %v715
    %v1235 = vunpack.c.l.b16 %v716
    %v1236 = vunpack.c.l.b16 %v717
    %v1237 = vunpack.c.l.b16 %v718
    %v1238 = vunpack.c.l.b16 %v719
    %v1239 = vunpack.c.l.b16 %v720
    %v1240 = vunpack.c.l.b16 %v721
    %v1241 = vunpack.c.l.b16 %v722
    %v1242 = vunpack.c.l.b16 %v723
    %v1243 = vunpack.c.l.b16 %v724
    %v1244 = vunpack.c.l.b16 %v725
    %v1245 = vunpack.c.l.b16 %v726
    %v1246 = vunpack.c.l.b16 %v727
    %v1247 = vunpack.c.l.b16 %v728
    %v1248 = vunpack.c.l.b16 %v729
    %v1249 = vunpack.c.l.b16 %v730
    %v1250 = vunpack.c.l.b16 %v731
    %v1251 = vunpack.c.l.b16 %v732
    %v1252 = vunpack.c.l.b16 %v733
    %v1253 = vunpack.c.l.b16 %v734
    %v1254 = vunpack.c.l.b16 %v735
    %v1255 = vunpack.c.l.b16 %v736
    %v1256 = vunpack.c.l.b16 %v737
    %v1257 = vunpack.c.l.b16 %v738
    %v1258 = vunpack.c.l.b16 %v739
    %v1259 = vunpack.c.l.b16 %v740
    %v1260 = vunpack.c.l.b16 %v741
    %v1261 = vunpack.c.l.b16 %v742
    %v1262 = vunpack.c.l.b16 %v743
    %v1263 = vunpack.c.l.b16 %v744
    %v1264 = vunpack.c.l.b16 %v745
    %v1265 = vunpack.c.l.b16 %v746
    %v1266 = vunpack.c.l.b16 %v747
    %v1267 = vunpack.c.l.b16 %v748
    %v1268 = vunpack.c.l.b16 %v749
    %v1269 = vunpack.c.l.b16 %v750
    %v1270 = vunpack.c.l.b16 %v751
    %v1271 = vunpack.c.l.b16 %v752
    %v1272 = vunpack.c.l.b16 %v753
    %v1273 = vunpack.c.l.b16 %v754
    %v1274 = vunpack.c.l.b16 %v755
    %v1275 = vunpack.c.l.b16 %v756
    %v1276 = vunpack.c.l.b16 %v757
    %v1277 = vunpack.c.l.b16 %v758
    %v1278 = vunpack.c.l.b16 %v759
    %v1279 = vunpack.c.l.b16 %v760
    %v1280 = vunpack.c.l.b16 %v761
    %v1281 = vunpack.c.l.b16 %v762
    %v1282 = vunpack.c.l.b16 %v763
    %v1283 = vunpack.c.l.b16 %v764
    %v1284 = vunpack.c.l.b16 %v765
    %v1285 = vunpack.c.l.b16 %v766
    %v1286 = vunpack.c.l.b16 %v767
    %v1287 = vunpack.c.l.b16 %v768
    %v1288 = vunpack.c.l.b16 %v769
    %v1289 = vunpack.c.l.b16 %v770
    %v1290 = vunpack.c.l.b16 %v771
    %v1291 = vunpack.c.l.b16 %v772
    %v1292 = vunpack.c.l.b16 %v773
    %v1293 = vunpack.c.l.b16 %v774
    %v1294 = vunpack.c.l.b16 %v775
    %v1295 = vunpack.c.l.b16 %v776
    %v1296 = vunpack.c.l.b16 %v777
    %v1297 = vunpack.c.l.b16 %v778
    %v1298 = vunpack.c.l.b16 %v779
    %v1299 = vunpack.c.l.b16 %v780
    %v1300 = vunpack.c.l.b16 %v781
    %v1301 = vunpack.c.l.b16 %v782
    %v1302 = vunpack.c.l.b16 %v783
    %v1303 = vunpack.c.l.b16 %v784
    %v1304 = vunpack.c.l.b16 %v785
    %v1305 = vunpack.c.l.b16 %v786
    %v1306 = vunpack.c.l.b16 %v787
    %v1307 = vunpack.c.l.b16 %v788
    %v1308 = vunpack.c.l.b16 %v789
    %v1309 = vunpack.c.l.b16 %v790
    %v1310 = vunpack.c.l.b16 %v791
    %v1311 = vunpack.c.l.b16 %v792
    %v1312 = vunpack.c.l.b16 %v793
    %v1313 = vunpack.c.l.b16 %v794
    %v1314 = vunpack.c.l.b16 %v795
    %v1315 = vunpack.c.l.b16 %v796
    %v1316 = vunpack.c.l.b16 %v797
    %v1317 = vunpack.c.l.b16 %v798
    %v1318 = vunpack.c.l.b16 %v799
    %v1319 = vunpack.c.l.b16 %v800
    %v1320 = vunpack.c.l.b16 %v801
    %v1321 = vunpack.c.l.b16 %v802
    %v1322 = vunpack.c.l.b16 %v803
    %v1323 = vunpack.c.l.b16 %v804
    %v1324 = vunpack.c.l.b16 %v805
    %v1325 = vunpack.c.l.b16 %v806
    %v1326 = vunpack.c.l.b16 %v807
    %v1327 = vunpack.c.l.b16 %v808
    %v1328 = vunpack.c.l.b16 %v809
    %v1329 = vunpack.c.l.b16 %v810
    %v1330 = vunpack.c.l.b16 %v811
    %v1331 = vunpack.c.l.b16 %v812
    %v1332 = vunpack.c.l.b16 %v813
    %v1333 = vunpack.c.l.b16 %v814
    %v1334 = vunpack.c.l.b16 %v815
    %v1335 = vunpack.c.l.b16 %v816
    %v1336 = vunpack.c.l.b16 %v817
    %v1337 = vunpack.c.l.b16 %v818
    %v1338 = vunpack.c.l.b16 %v819
    %v1339 = vunpack.c.l.b16 %v820
    %v1340 = vunpack.c.l.b16 %v821
    %v1341 = vunpack.c.l.b16 %v822
    %v1342 = vunpack.c.l.b16 %v823
    %v1343 = vunpack.c.l.b16 %v824
    %v1344 = vunpack.c.l.b16 %v825
    %v1345 = vunpack.c.l.b16 %v826
    %v1346 = vunpack.c.l.b16 %v827
    %v1347 = vunpack.c.l.b16 %v828
    %v1348 = vunpack.c.l.b16 %v829
    %v1349 = vunpack.c.l.b16 %v830
    %v1350 = vunpack.c.l.b16 %v831
    %v1351 = vunpack.c.l.b16 %v832
    %v1352 = vunpack.c.l.b16 %v833
    %v1353 = vunpack.c.l.b16 %v834
    %v1354 = vunpack.c.l.b16 %v835
    %v1355 = vunpack.c.l.b16 %v836
    %v1356 = vunpack.c.l.b16 %v837
    %v1357 = vunpack.c.l.b16 %v838
    %v1358 = vunpack.c.l.b16 %v839
    %v1359 = vunpack.c.l.b16 %v840
    %v1360 = vunpack.c.l.b16 %v841
    %v1361 = vunpack.c.l.b16 %v842
    %v1362 = vunpack.c.l.b16 %v843
    %v1363 = vunpack.c.l.b16 %v844
    %v1364 = vpack.c.b16 %v1109, %v1108
    %v1365 = vpack.c.b16 %v1111, %v1110
    %v1366 = vpack.c.b16 %v1113, %v1112
    %v1367 = vpack.c.b16 %v1115, %v1114
    %v1368 = vpack.c.b16 %v1117, %v1116
    %v1369 = vpack.c.b16 %v1119, %v1118
    %v1370 = vpack.c.b16 %v1121, %v1120
    %v1371 = vpack.c.b16 %v1123, %v1122
    %v1372 = vpack.c.b16 %v1125, %v1124
    %v1373 = vpack.c.b16 %v1127, %v1126
    %v1374 = vpack.c.b16 %v1129, %v1128
    %v1375 = vpack.c.b16 %v1131, %v1130
    %v1376 = vpack.c.b16 %v1133, %v1132
    %v1377 = vpack.c.b16 %v1135, %v1134
    %v1378 = vpack.c.b16 %v1137, %v1136
    %v1379 = vpack.c.b16 %v1139, %v1138
    %v1380 = vpack.c.b16 %v1141, %v1140
    %v1381 = vpack.c.b16 %v1143, %v1142
    %v1382 = vpack.c.b16 %v1145, %v1144
    %v1383 = vpack.c.b16 %v1147, %v1146
    %v1384 = vpack.c.b16 %v1149, %v1148
    %v1385 = vpack.c.b16 %v1151, %v1150
    %v1386 = vpack.c.b16 %v1153, %v1152
    %v1387 = vpack.c.b16 %v1155, %v1154
    %v1388 = vpack.c.b16 %v1157, %v1156
    %v1389 = vpack.c.b16 %v1159, %v1158
    %v1390 = vpack.c.b16 %v1161, %v1160
    %v1391 = vpack.c.b16 %v1163, %v1162
    %v1392 = vpack.c.b16 %v1165, %v1164
    %v1393 = vpack.c.b16 %v1167, %v1166
    %v1394 = vpack.c.b16 %v1169, %v1168
    %v1395 = vpack.c.b16 %v1171, %v1170
    %v1396 = vpack.c.b16 %v1173, %v1172
    %v1397 = vpack.c.b16 %v1175, %v1174
    %v1398 = vpack.c.b16 %v1177, %v1176
    %v1399 = vpack.c.b16 %v1179, %v1178
    %v1400 = vpack.c.b16 %v1181, %v1180
    %v1401 = vpack.c.b16 %v1183, %v1182
    %v1402 = vpack.c.b16 %v1185, %v1184
    %v1403 = vpack.c.b16 %v1187, %v1186
    %v1404 = vpack.c.b16 %v1189, %v1188
    %v1405 = vpack.c.b16 %v1191, %v1190
    %v1406 = vpack.c.b16 %v1193, %v1192
    %v1407 = vpack.c.b16 %v1195, %v1194
    %v1408 = vpack.c.b16 %v1197, %v1196
    %v1409 = vpack.c.b16 %v1199, %v1198
    %v1410 = vpack.c.b16 %v1201, %v1200
    %v1411 = vpack.c.b16 %v1203, %v1202
    %v1412 = vpack.c.b16 %v1205, %v1204
    %v1413 = vpack.c.b16 %v1207, %v1206
    %v1414 = vpack.c.b16 %v1209, %v1208
    %v1415 = vpack.c.b16 %v1211, %v1210
    %v1416 = vpack.c.b16 %v1213, %v1212
    %v1417 = vpack.c.b16 %v1215, %v1214
    %v1418 = vpack.c.b16 %v1217, %v1216
    %v1419 = vpack.c.b16 %v1219, %v1218
    %v1420 = vpack.c.b16 %v1221, %v1220
    %v1421 = vpack.c.b16 %v1223, %v1222
    %v1422 = vpack.c.b16 %v1225, %v1224
    %v1423 = vpack.c.b16 %v1227, %v1226
    %v1424 = vpack.c.b16 %v1229, %v1228
    %v1425 = vpack.c.b16 %v1231, %v1230
    %v1426 = vpack.c.b16 %v1233, %v1232
    %v1427 = vpack.c.b16 %v1235, %v1234
    %v1428 = vpack.c.b16 %v1237, %v1236
    %v1429 = vpack.c.b16 %v1239, %v1238
    %v1430 = vpack.c.b16 %v1241, %v1240
    %v1431 = vpack.c.b16 %v1243, %v1242
    %v1432 = vpack.c.b16 %v1245, %v1244
    %v1433 = vpack.c.b16 %v1247, %v1246
    %v1434 = vpack.c.b16 %v1249, %v1248
    %v1435 = vpack.c.b16 %v1251, %v1250
    %v1436 = vpack.c.b16 %v1253, %v1252
    %v1437 = vpack.c.b16 %v1255, %v1254
    %v1438 = vpack.c.b16 %v1257, %v1256
    %v1439 = vpack.c.b16 %v1259, %v1258
    %v1440 = vpack.c.b16 %v1261, %v1260
    %v1441 = vpack.c.b16 %v1263, %v1262
    %v1442 = vpack.c.b16 %v1265, %v1264
    %v1443 = vpack.c.b16 %v1267, %v1266
    %v1444 = vpack.c.b16 %v1269, %v1268
    %v1445 = vpack.c.b16 %v1271, %v1270
    %v1446 = vpack.c.b16 %v1273, %v1272
    %v1447 = vpack.c.b16 %v1275, %v1274
    %v1448 = vpack.c.b16 %v1277, %v1276
    %v1449 = vpack.c.b16 %v1279, %v1278
    %v1450 = vpack.c.b16 %v1281, %v1280
    %v1451 = vpack.c.b16 %v1283, %v1282
    %v1452 = vpack.c.b16 %v1285, %v1284
    %v1453 = vpack.c.b16 %v1287, %v1286
    %v1454 = vpack.c.b16 %v1289, %v1288
    %v1455 = vpack.c.b16 %v1291, %v1290
    %v1456 = vpack.c.b16 %v1293, %v1292
    %v1457 = vpack.c.b16 %v1295, %v1294
    %v1458 = vpack.c.b16 %v1297, %v1296
    %v1459 = vpack.c.b16 %v1299, %v1298
    %v1460 = vpack.c.b16 %v1301, %v1300
    %v1461 = vpack.c.b16 %v1303, %v1302
    %v1462 = vpack.c.b16 %v1305, %v1304
    %v1463 = vpack.c.b16 %v1307, %v1306
    %v1464 = vpack.c.b16 %v1309, %v1308
    %v1465 = vpack.c.b16 %v1311, %v1310
    %v1466 = vpack.c.b16 %v1313, %v1312
    %v1467 = vpack.c.b16 %v1315, %v1314
    %v1468 = vpack.c.b16 %v1317, %v1316
    %v1469 = vpack.c.b16 %v1319, %v1318
    %v1470 = vpack.c.b16 %v1321, %v1320
    %v1471 = vpack.c.b16 %v1323, %v1322
    %v1472 = vpack.c.b16 %v1325, %v1324
    %v1473 = vpack.c.b16 %v1327, %v1326
    %v1474 = vpack.c.b16 %v1329, %v1328
    %v1475 = vpack.c.b16 %v1331, %v1330
    %v1476 = vpack.c.b16 %v1333, %v1332
    %v1477 = vpack.c.b16 %v1335, %v1334
    %v1478 = vpack.c.b16 %v1337, %v1336
    %v1479 = vpack.c.b16 %v1339, %v1338
    %v1480 = vpack.c.b16 %v1341, %v1340
    %v1481 = vpack.c.b16 %v1343, %v1342
    %v1482 = vpack.c.b16 %v1345, %v1344
    %v1483 = vpack.c.b16 %v1347, %v1346
    %v1484 = vpack.c.b16 %v1349, %v1348
    %v1485 = vpack.c.b16 %v1351, %v1350
    %v1486 = vpack.c.b16 %v1353, %v1352
    %v1487 = vpack.c.b16 %v1355, %v1354
    %v1488 = vpack.c.b16 %v1357, %v1356
    %v1489 = vpack.c.b16 %v1359, %v1358
    %v1490 = vpack.c.b16 %v1361, %v1360
    %v1491 = vpack.c.b16 %v1363, %v1362
    %1620 = vmatprep.subr.bf16.mxu0 0
    %1621 = vmatpush1.bf16.msra.mxu0 %v1371
    %1622 = vmatprep.subr.bf16.mxu0 0
    %1623 = vmatpush1.bf16.msra.mxu0 %v1370
    %1624 = vmatprep.subr.bf16.mxu0 0
    %1625 = vmatpush1.bf16.msra.mxu0 %v1369
    %1626 = vmatprep.subr.bf16.mxu0 0
    %1627 = vmatpush1.bf16.msra.mxu0 %v1368
    %1628 = vmatprep.subr.bf16.mxu0 0
    %1629 = vmatpush1.bf16.msra.mxu0 %v1367
    %1630 = vmatprep.subr.bf16.mxu0 0
    %1631 = vmatpush1.bf16.msra.mxu0 %v1366
    %1632 = vmatprep.subr.bf16.mxu0 0
    %1633 = vmatpush1.bf16.msra.mxu0 %v1365
    %1634 = vmatprep.subr.bf16.mxu0 0
    %1635 = vmatpush1.bf16.msra.mxu0 %v1364
    %1636 = vmatprep.subr.bf16.mxu0 0
    %1637 = vmatpush2.bf16.msra.mxu0 %v1379
    %1638 = vmatprep.subr.bf16.mxu0 0
    %1639 = vmatpush2.bf16.msra.mxu0 %v1378
    %1640 = vmatprep.subr.bf16.mxu0 0
    %1641 = vmatpush2.bf16.msra.mxu0 %v1377
    %1642 = vmatprep.subr.bf16.mxu0 0
    %1643 = vmatpush2.bf16.msra.mxu0 %v1376
    %1644 = vmatprep.subr.bf16.mxu0 0
    %1645 = vmatpush2.bf16.msra.mxu0 %v1375
    %1646 = vmatprep.subr.bf16.mxu0 0
    %1647 = vmatpush2.bf16.msra.mxu0 %v1374
    %1648 = vmatprep.subr.bf16.mxu0 0
    %1649 = vmatpush2.bf16.msra.mxu0 %v1373
    %1650 = vmatprep.subr.bf16.mxu0 0
    %1651 = vmatpush2.bf16.msra.mxu0 %v1372
    %1652 = vmatprep.mubr.bf16.mxu0 %v560
    %1653 = vmatmul.mubr.bf16.gmra.mxu0 %v557
    %v1654 = vpop.f32.mrf.mxu0
    %v1655 = vadd.f32 %v850, %v1654
    %v1656 = vpop.f32.mrf.mxu0
    %v1657 = vpop.f32.mrf.mxu0
    %v1658 = vpop.f32.mrf.mxu0
    %1659 = vdwg.mxu0
    %1660 = vmatprep.subr.bf16.mxu0 0
    %1661 = vmatpush1.bf16.msra.mxu0 %v1387
    %1662 = vmatprep.subr.bf16.mxu0 0
    %1663 = vmatpush1.bf16.msra.mxu0 %v1386
    %1664 = vmatprep.subr.bf16.mxu0 0
    %1665 = vmatpush1.bf16.msra.mxu0 %v1385
    %1666 = vmatprep.subr.bf16.mxu0 0
    %1667 = vmatpush1.bf16.msra.mxu0 %v1384
    %1668 = vmatprep.subr.bf16.mxu0 0
    %1669 = vmatpush1.bf16.msra.mxu0 %v1383
    %1670 = vmatprep.subr.bf16.mxu0 0
    %1671 = vmatpush1.bf16.msra.mxu0 %v1382
    %1672 = vmatprep.subr.bf16.mxu0 0
    %1673 = vmatpush1.bf16.msra.mxu0 %v1381
    %1674 = vmatprep.subr.bf16.mxu0 0
    %1675 = vmatpush1.bf16.msra.mxu0 %v1380
    %1676 = vmatprep.subr.bf16.mxu0 0
    %1677 = vmatpush2.bf16.msra.mxu0 %v1395
    %1678 = vmatprep.subr.bf16.mxu0 0
    %1679 = vmatpush2.bf16.msra.mxu0 %v1394
    %1680 = vmatprep.subr.bf16.mxu0 0
    %1681 = vmatpush2.bf16.msra.mxu0 %v1393
    %1682 = vmatprep.subr.bf16.mxu0 0
    %1683 = vmatpush2.bf16.msra.mxu0 %v1392
    %1684 = vmatprep.subr.bf16.mxu0 0
    %1685 = vmatpush2.bf16.msra.mxu0 %v1391
    %1686 = vmatprep.subr.bf16.mxu0 0
    %1687 = vmatpush2.bf16.msra.mxu0 %v1390
    %1688 = vmatprep.subr.bf16.mxu0 0
    %1689 = vmatpush2.bf16.msra.mxu0 %v1389
    %1690 = vmatprep.subr.bf16.mxu0 0
    %1691 = vmatpush2.bf16.msra.mxu0 %v1388
    %1692 = vmatprep.mubr.bf16.mxu0 %v564
    %1693 = vmatmul.mubr.bf16.gmra.mxu0 %v562
    %v1694 = vpop.f32.mrf.mxu0
    %v1695 = vadd.f32 %v1655, %v1694
    %v1696 = vpop.f32.mrf.mxu0
    %v1697 = vpop.f32.mrf.mxu0
    %v1698 = vpop.f32.mrf.mxu0
    %1699 = vdwg.mxu0
    %1700 = vmatprep.subr.bf16.mxu0 0
    %1701 = vmatpush1.bf16.msra.mxu0 %v1403
    %1702 = vmatprep.subr.bf16.mxu0 0
    %1703 = vmatpush1.bf16.msra.mxu0 %v1402
    %1704 = vmatprep.subr.bf16.mxu0 0
    %1705 = vmatpush1.bf16.msra.mxu0 %v1401
    %1706 = vmatprep.subr.bf16.mxu0 0
    %1707 = vmatpush1.bf16.msra.mxu0 %v1400
    %1708 = vmatprep.subr.bf16.mxu0 0
    %1709 = vmatpush1.bf16.msra.mxu0 %v1399
    %1710 = vmatprep.subr.bf16.mxu0 0
    %1711 = vmatpush1.bf16.msra.mxu0 %v1398
    %1712 = vmatprep.subr.bf16.mxu0 0
    %1713 = vmatpush1.bf16.msra.mxu0 %v1397
    %1714 = vmatprep.subr.bf16.mxu0 0
    %1715 = vmatpush1.bf16.msra.mxu0 %v1396
    %1716 = vmatprep.subr.bf16.mxu0 0
    %1717 = vmatpush2.bf16.msra.mxu0 %v1411
    %1718 = vmatprep.subr.bf16.mxu0 0
    %1719 = vmatpush2.bf16.msra.mxu0 %v1410
    %1720 = vmatprep.subr.bf16.mxu0 0
    %1721 = vmatpush2.bf16.msra.mxu0 %v1409
    %1722 = vmatprep.subr.bf16.mxu0 0
    %1723 = vmatpush2.bf16.msra.mxu0 %v1408
    %1724 = vmatprep.subr.bf16.mxu0 0
    %1725 = vmatpush2.bf16.msra.mxu0 %v1407
    %1726 = vmatprep.subr.bf16.mxu0 0
    %1727 = vmatpush2.bf16.msra.mxu0 %v1406
    %1728 = vmatprep.subr.bf16.mxu0 0
    %1729 = vmatpush2.bf16.msra.mxu0 %v1405
    %1730 = vmatprep.subr.bf16.mxu0 0
    %1731 = vmatpush2.bf16.msra.mxu0 %v1404
    %1732 = vmatprep.mubr.bf16.mxu0 %v568
    %1733 = vmatmul.mubr.bf16.gmra.mxu0 %v566
    %v1734 = vpop.f32.mrf.mxu0
    %v1735 = vadd.f32 %v1695, %v1734
    %v1736 = vpop.f32.mrf.mxu0
    %v1737 = vpop.f32.mrf.mxu0
    %v1738 = vpop.f32.mrf.mxu0
    %1739 = vdwg.mxu0
    %1740 = vmatprep.subr.bf16.mxu0 0
    %1741 = vmatpush1.bf16.msra.mxu0 %v1419
    %1742 = vmatprep.subr.bf16.mxu0 0
    %1743 = vmatpush1.bf16.msra.mxu0 %v1418
    %1744 = vmatprep.subr.bf16.mxu0 0
    %1745 = vmatpush1.bf16.msra.mxu0 %v1417
    %1746 = vmatprep.subr.bf16.mxu0 0
    %1747 = vmatpush1.bf16.msra.mxu0 %v1416
    %1748 = vmatprep.subr.bf16.mxu0 0
    %1749 = vmatpush1.bf16.msra.mxu0 %v1415
    %1750 = vmatprep.subr.bf16.mxu0 0
    %1751 = vmatpush1.bf16.msra.mxu0 %v1414
    %1752 = vmatprep.subr.bf16.mxu0 0
    %1753 = vmatpush1.bf16.msra.mxu0 %v1413
    %1754 = vmatprep.subr.bf16.mxu0 0
    %1755 = vmatpush1.bf16.msra.mxu0 %v1412
    %1756 = vmatprep.subr.bf16.mxu0 0
    %1757 = vmatpush2.bf16.msra.mxu0 %v1427
    %1758 = vmatprep.subr.bf16.mxu0 0
    %1759 = vmatpush2.bf16.msra.mxu0 %v1426
    %1760 = vmatprep.subr.bf16.mxu0 0
    %1761 = vmatpush2.bf16.msra.mxu0 %v1425
    %1762 = vmatprep.subr.bf16.mxu0 0
    %1763 = vmatpush2.bf16.msra.mxu0 %v1424
    %1764 = vmatprep.subr.bf16.mxu0 0
    %1765 = vmatpush2.bf16.msra.mxu0 %v1423
    %1766 = vmatprep.subr.bf16.mxu0 0
    %1767 = vmatpush2.bf16.msra.mxu0 %v1422
    %1768 = vmatprep.subr.bf16.mxu0 0
    %1769 = vmatpush2.bf16.msra.mxu0 %v1421
    %1770 = vmatprep.subr.bf16.mxu0 0
    %1771 = vmatpush2.bf16.msra.mxu0 %v1420
    %1772 = vmatprep.mubr.bf16.mxu0 %v572
    %1773 = vmatmul.mubr.bf16.gmra.mxu0 %v570
    %v1774 = vpop.f32.mrf.mxu0
    %v1775 = vadd.f32 %v1735, %v1774
    %v1776 = vpop.f32.mrf.mxu0
    %v1777 = vpop.f32.mrf.mxu0
    %v1778 = vpop.f32.mrf.mxu0
    %1779 = vdwg.mxu0
    %1780 = vmatprep.subr.bf16.mxu0 0
    %1781 = vmatpush1.bf16.msra.mxu0 %v1435
    %1782 = vmatprep.subr.bf16.mxu0 0
    %1783 = vmatpush1.bf16.msra.mxu0 %v1434
    %1784 = vmatprep.subr.bf16.mxu0 0
    %1785 = vmatpush1.bf16.msra.mxu0 %v1433
    %1786 = vmatprep.subr.bf16.mxu0 0
    %1787 = vmatpush1.bf16.msra.mxu0 %v1432
    %1788 = vmatprep.subr.bf16.mxu0 0
    %1789 = vmatpush1.bf16.msra.mxu0 %v1431
    %1790 = vmatprep.subr.bf16.mxu0 0
    %1791 = vmatpush1.bf16.msra.mxu0 %v1430
    %1792 = vmatprep.subr.bf16.mxu0 0
    %1793 = vmatpush1.bf16.msra.mxu0 %v1429
    %1794 = vmatprep.subr.bf16.mxu0 0
    %1795 = vmatpush1.bf16.msra.mxu0 %v1428
    %1796 = vmatprep.subr.bf16.mxu0 0
    %1797 = vmatpush2.bf16.msra.mxu0 %v1443
    %1798 = vmatprep.subr.bf16.mxu0 0
    %1799 = vmatpush2.bf16.msra.mxu0 %v1442
    %1800 = vmatprep.subr.bf16.mxu0 0
    %1801 = vmatpush2.bf16.msra.mxu0 %v1441
    %1802 = vmatprep.subr.bf16.mxu0 0
    %1803 = vmatpush2.bf16.msra.mxu0 %v1440
    %1804 = vmatprep.subr.bf16.mxu0 0
    %1805 = vmatpush2.bf16.msra.mxu0 %v1439
    %1806 = vmatprep.subr.bf16.mxu0 0
    %1807 = vmatpush2.bf16.msra.mxu0 %v1438
    %1808 = vmatprep.subr.bf16.mxu0 0
    %1809 = vmatpush2.bf16.msra.mxu0 %v1437
    %1810 = vmatprep.subr.bf16.mxu0 0
    %1811 = vmatpush2.bf16.msra.mxu0 %v1436
    %1812 = vmatprep.mubr.bf16.mxu0 %v575
    %1813 = vmatmul.mubr.bf16.gmra.mxu0 %v558
    %v1814 = vpop.f32.mrf.mxu0
    %v1815 = vadd.f32 %v1775, %v1814
    %v1816 = vpop.f32.mrf.mxu0
    %v1817 = vpop.f32.mrf.mxu0
    %v1818 = vpop.f32.mrf.mxu0
    %1819 = vdwg.mxu0
    %1820 = vmatprep.subr.bf16.mxu0 0
    %1821 = vmatpush1.bf16.msra.mxu0 %v1451
    %1822 = vmatprep.subr.bf16.mxu0 0
    %1823 = vmatpush1.bf16.msra.mxu0 %v1450
    %1824 = vmatprep.subr.bf16.mxu0 0
    %1825 = vmatpush1.bf16.msra.mxu0 %v1449
    %1826 = vmatprep.subr.bf16.mxu0 0
    %1827 = vmatpush1.bf16.msra.mxu0 %v1448
    %1828 = vmatprep.subr.bf16.mxu0 0
    %1829 = vmatpush1.bf16.msra.mxu0 %v1447
    %1830 = vmatprep.subr.bf16.mxu0 0
    %1831 = vmatpush1.bf16.msra.mxu0 %v1446
    %1832 = vmatprep.subr.bf16.mxu0 0
    %1833 = vmatpush1.bf16.msra.mxu0 %v1445
    %1834 = vmatprep.subr.bf16.mxu0 0
    %1835 = vmatpush1.bf16.msra.mxu0 %v1444
    %1836 = vmatprep.subr.bf16.mxu0 0
    %1837 = vmatpush2.bf16.msra.mxu0 %v1459
    %1838 = vmatprep.subr.bf16.mxu0 0
    %1839 = vmatpush2.bf16.msra.mxu0 %v1458
    %1840 = vmatprep.subr.bf16.mxu0 0
    %1841 = vmatpush2.bf16.msra.mxu0 %v1457
    %1842 = vmatprep.subr.bf16.mxu0 0
    %1843 = vmatpush2.bf16.msra.mxu0 %v1456
    %1844 = vmatprep.subr.bf16.mxu0 0
    %1845 = vmatpush2.bf16.msra.mxu0 %v1455
    %1846 = vmatprep.subr.bf16.mxu0 0
    %1847 = vmatpush2.bf16.msra.mxu0 %v1454
    %1848 = vmatprep.subr.bf16.mxu0 0
    %1849 = vmatpush2.bf16.msra.mxu0 %v1453
    %1850 = vmatprep.subr.bf16.mxu0 0
    %1851 = vmatpush2.bf16.msra.mxu0 %v1452
    %1852 = vmatprep.mubr.bf16.mxu0 %v579
    %1853 = vmatmul.mubr.bf16.gmra.mxu0 %v577
    %v1854 = vpop.f32.mrf.mxu0
    %v1855 = vadd.f32 %v1815, %v1854
    %v1856 = vpop.f32.mrf.mxu0
    %v1857 = vpop.f32.mrf.mxu0
    %v1858 = vpop.f32.mrf.mxu0
    %1859 = vdwg.mxu0
    %1860 = vmatprep.subr.bf16.mxu0 0
    %1861 = vmatpush1.bf16.msra.mxu0 %v1467
    %1862 = vmatprep.subr.bf16.mxu0 0
    %1863 = vmatpush1.bf16.msra.mxu0 %v1466
    %1864 = vmatprep.subr.bf16.mxu0 0
    %1865 = vmatpush1.bf16.msra.mxu0 %v1465
    %1866 = vmatprep.subr.bf16.mxu0 0
    %1867 = vmatpush1.bf16.msra.mxu0 %v1464
    %1868 = vmatprep.subr.bf16.mxu0 0
    %1869 = vmatpush1.bf16.msra.mxu0 %v1463
    %1870 = vmatprep.subr.bf16.mxu0 0
    %1871 = vmatpush1.bf16.msra.mxu0 %v1462
    %1872 = vmatprep.subr.bf16.mxu0 0
    %1873 = vmatpush1.bf16.msra.mxu0 %v1461
    %1874 = vmatprep.subr.bf16.mxu0 0
    %1875 = vmatpush1.bf16.msra.mxu0 %v1460
    %1876 = vmatprep.subr.bf16.mxu0 0
    %1877 = vmatpush2.bf16.msra.mxu0 %v1475
    %1878 = vmatprep.subr.bf16.mxu0 0
    %1879 = vmatpush2.bf16.msra.mxu0 %v1474
    %1880 = vmatprep.subr.bf16.mxu0 0
    %1881 = vmatpush2.bf16.msra.mxu0 %v1473
    %1882 = vmatprep.subr.bf16.mxu0 0
    %1883 = vmatpush2.bf16.msra.mxu0 %v1472
    %1884 = vmatprep.subr.bf16.mxu0 0
    %1885 = vmatpush2.bf16.msra.mxu0 %v1471
    %1886 = vmatprep.subr.bf16.mxu0 0
    %1887 = vmatpush2.bf16.msra.mxu0 %v1470
    %1888 = vmatprep.subr.bf16.mxu0 0
    %1889 = vmatpush2.bf16.msra.mxu0 %v1469
    %1890 = vmatprep.subr.bf16.mxu0 0
    %1891 = vmatpush2.bf16.msra.mxu0 %v1468
    %1892 = vmatprep.mubr.bf16.mxu0 %v583
    %1893 = vmatmul.mubr.bf16.gmra.mxu0 %v581
    %v1894 = vpop.f32.mrf.mxu0
    %v1895 = vadd.f32 %v1855, %v1894
    %v1896 = vpop.f32.mrf.mxu0
    %v1897 = vpop.f32.mrf.mxu0
    %v1898 = vpop.f32.mrf.mxu0
    %1899 = vdwg.mxu0
    %1900 = vmatprep.subr.bf16.mxu0 0
    %1901 = vmatpush1.bf16.msra.mxu0 %v1483
    %1902 = vmatprep.subr.bf16.mxu0 0
    %1903 = vmatpush1.bf16.msra.mxu0 %v1482
    %1904 = vmatprep.subr.bf16.mxu0 0
    %1905 = vmatpush1.bf16.msra.mxu0 %v1481
    %1906 = vmatprep.subr.bf16.mxu0 0
    %1907 = vmatpush1.bf16.msra.mxu0 %v1480
    %1908 = vmatprep.subr.bf16.mxu0 0
    %1909 = vmatpush1.bf16.msra.mxu0 %v1479
    %1910 = vmatprep.subr.bf16.mxu0 0
    %1911 = vmatpush1.bf16.msra.mxu0 %v1478
    %1912 = vmatprep.subr.bf16.mxu0 0
    %1913 = vmatpush1.bf16.msra.mxu0 %v1477
    %1914 = vmatprep.subr.bf16.mxu0 0
    %1915 = vmatpush1.bf16.msra.mxu0 %v1476
    %1916 = vmatprep.subr.bf16.mxu0 0
    %1917 = vmatpush2.bf16.msra.mxu0 %v1491
    %1918 = vmatprep.subr.bf16.mxu0 0
    %1919 = vmatpush2.bf16.msra.mxu0 %v1490
    %1920 = vmatprep.subr.bf16.mxu0 0
    %1921 = vmatpush2.bf16.msra.mxu0 %v1489
    %1922 = vmatprep.subr.bf16.mxu0 0
    %1923 = vmatpush2.bf16.msra.mxu0 %v1488
    %1924 = vmatprep.subr.bf16.mxu0 0
    %1925 = vmatpush2.bf16.msra.mxu0 %v1487
    %1926 = vmatprep.subr.bf16.mxu0 0
    %1927 = vmatpush2.bf16.msra.mxu0 %v1486
    %1928 = vmatprep.subr.bf16.mxu0 0
    %1929 = vmatpush2.bf16.msra.mxu0 %v1485
    %1930 = vmatprep.subr.bf16.mxu0 0
    %1931 = vmatpush2.bf16.msra.mxu0 %v1484
    %1932 = vmatprep.mubr.bf16.mxu0 %v587
    %1933 = vmatmul.mubr.bf16.gmra.mxu0 %v585
    %v1934 = vpop.f32.mrf.mxu0
    %v1935 = vadd.f32 %v1895, %v1934
    %v1936 = vpop.f32.mrf.mxu0
    %v1937 = vpop.f32.mrf.mxu0
    %v1938 = vpop.f32.mrf.mxu0
    %1939 = vdwg.mxu0
    %v1940 = vmax.f32 %v1935, 0.0
    %v1941 = vpack.c.bf16 %v1940, %v1940
    %v1942 = vld [vmem:[%s5] sm:$0xff]
    %v1943 = vld [vmem:[%s5 + $0x8] sm:$0xf]
    %v1944 = vld [vmem:[%s5 + $0xc] sm:$0xff]
    %v1945 = vld [vmem:[%s5 + $0x14] sm:$0xf]
    %v1946 = vld [vmem:[%s5 + $0x18] sm:$0xff]
    %v1947 = vld [vmem:[%s5 + $0x20] sm:$0xf]
    %v1948 = vld [vmem:[%s5 + $0x24] sm:$0xff]
    %v1949 = vld [vmem:[%s5 + $0x2c] sm:$0xf]
    %v1950 = vld [vmem:[%s6] sm:$0x7]
    %v1952 = vlaneseq
    %v1953 = vshrl.u32 %v1952, 7
    %v1954 = vsub.s32 0, %v1953
    %v1955 = vrot.slane %v1950, %v1954
    %v1956 = vlaneseq
    %v1957 = vshrl.u32 %v1956, 7
    %v1958 = vsub.s32 1, %v1957
    %v1959 = vrot.slane %v1950, %v1958
    %v1960 = vlaneseq
    %v1961 = vshrl.u32 %v1960, 7
    %v1962 = vsub.s32 2, %v1961
    %v1963 = vrot.slane %v1950, %v1962
    %v1975 = vunpack.c.l.b16 %v1942
    %v1976 = vunpack.c.h.b16 %v1942
    %v1977 = vunpack.c.l.b16 %v1943
    %v1978 = vunpack.c.l.b16 %v1944
    %v1979 = vunpack.c.h.b16 %v1944
    %v1980 = vunpack.c.l.b16 %v1945
    %v1981 = vunpack.c.l.b16 %v1946
    %v1982 = vunpack.c.h.b16 %v1946
    %v1983 = vunpack.c.l.b16 %v1947
    %v1984 = vunpack.c.l.b16 %v1948
    %v1985 = vunpack.c.h.b16 %v1948
    %v1986 = vunpack.c.l.b16 %v1949
    %v1987 = vpack.c.b16 %v1978, %v1975
    %v1988 = vpack.c.b16 %v1979, %v1976
    %v1989 = vpack.c.b16 %v1980, %v1977
    %v1990 = vpack.c.b16 %v1984, %v1981
    %v1991 = vpack.c.b16 %v1985, %v1982
    %v1992 = vpack.c.b16 %v1986, %v1983
    %vm1999 = vcmask 261120
    %v2001 = vsel %vm1999, %v1941, 0
    %2003 = vmatprep.subr.bf16.mxu0 0
    %2004 = vmatpush1.bf16.msra.mxu0 0
    %2005 = vmatprep.subr.bf16.mxu0 0
    %2006 = vmatpush1.bf16.msra.mxu0 0
    %2007 = vmatprep.subr.bf16.mxu0 0
    %2008 = vmatpush1.bf16.msra.mxu0 0
    %2009 = vmatprep.subr.bf16.mxu0 0
    %2010 = vmatpush1.bf16.msra.mxu0 0
    %2011 = vmatprep.subr.bf16.mxu0 0
    %2012 = vmatpush1.bf16.msra.mxu0 0
    %2013 = vmatprep.subr.bf16.mxu0 0
    %2014 = vmatpush1.bf16.msra.mxu0 0
    %2015 = vmatprep.subr.bf16.mxu0 %v1991
    %2016 = vmatpush1.bf16.msra.mxu0 %v1990
    %2017 = vmatprep.subr.bf16.mxu0 %v1988
    %2018 = vmatpush1.bf16.msra.mxu0 %v1987
    %2019 = vmatprep.subr.bf16.mxu0 0
    %2020 = vmatpush2.bf16.msra.mxu0 0
    %2021 = vmatprep.subr.bf16.mxu0 0
    %2022 = vmatpush2.bf16.msra.mxu0 0
    %2023 = vmatprep.subr.bf16.mxu0 0
    %2024 = vmatpush2.bf16.msra.mxu0 0
    %2025 = vmatprep.subr.bf16.mxu0 0
    %2026 = vmatpush2.bf16.msra.mxu0 0
    %2027 = vmatprep.subr.bf16.mxu0 0
    %2028 = vmatpush2.bf16.msra.mxu0 0
    %2029 = vmatprep.subr.bf16.mxu0 0
    %2030 = vmatpush2.bf16.msra.mxu0 0
    %2031 = vmatprep.subr.bf16.mxu0 0
    %2032 = vmatpush2.bf16.msra.mxu0 0
    %2033 = vmatprep.subr.bf16.mxu0 0
    %2034 = vmatpush2.bf16.msra.mxu0 0
    %2035 = vmatprep.mubr.bf16.mxu0 0
    %2036 = vmatmul.mubr.bf16.gmra.mxu0 %v2001
    %v2037 = vpop.f32.mrf.mxu0
    %v2038 = vadd.f32 %v1955, %v2037
    %v2039 = vpop.f32.mrf.mxu0
    %v2040 = vadd.f32 %v1959, %v2039
    %v2041 = vpop.f32.mrf.mxu0
    %v2042 = vpop.f32.mrf.mxu0
    %2043 = vdwg.mxu0
    %2044 = vmatprep.subr.bf16.mxu0 0
    %2045 = vmatpush1.bf16.msra.mxu0 0
    %2046 = vmatprep.subr.bf16.mxu0 0
    %2047 = vmatpush1.bf16.msra.mxu0 0
    %2048 = vmatprep.subr.bf16.mxu0 0
    %2049 = vmatpush1.bf16.msra.mxu0 0
    %2050 = vmatprep.subr.bf16.mxu0 0
    %2051 = vmatpush1.bf16.msra.mxu0 0
    %2052 = vmatprep.subr.bf16.mxu0 0
    %2053 = vmatpush1.bf16.msra.mxu0 0
    %2054 = vmatprep.subr.bf16.mxu0 0
    %2055 = vmatpush1.bf16.msra.mxu0 0
    %2056 = vmatprep.subr.bf16.mxu0 0
    %2057 = vmatpush1.bf16.msra.mxu0 %v1992
    %2058 = vmatprep.subr.bf16.mxu0 0
    %2059 = vmatpush1.bf16.msra.mxu0 %v1989
    %2060 = vmatprep.subr.bf16.mxu0 0
    %2061 = vmatpush2.bf16.msra.mxu0 0
    %2062 = vmatprep.subr.bf16.mxu0 0
    %2063 = vmatpush2.bf16.msra.mxu0 0
    %2064 = vmatprep.subr.bf16.mxu0 0
    %2065 = vmatpush2.bf16.msra.mxu0 0
    %2066 = vmatprep.subr.bf16.mxu0 0
    %2067 = vmatpush2.bf16.msra.mxu0 0
    %2068 = vmatprep.subr.bf16.mxu0 0
    %2069 = vmatpush2.bf16.msra.mxu0 0
    %2070 = vmatprep.subr.bf16.mxu0 0
    %2071 = vmatpush2.bf16.msra.mxu0 0
    %2072 = vmatprep.subr.bf16.mxu0 0
    %2073 = vmatpush2.bf16.msra.mxu0 0
    %2074 = vmatprep.subr.bf16.mxu0 0
    %2075 = vmatpush2.bf16.msra.mxu0 0
    %2076 = vmatprep.mubr.bf16.mxu0 0
    %2077 = vmatmul.mubr.bf16.gmra.mxu0 %v2001
    %v2078 = vpop.f32.mrf.mxu0
    %v2079 = vadd.f32 %v1963, %v2078
    %v2080 = vpop.f32.mrf.mxu0
    %v2081 = vpop.f32.mrf.mxu0
    %v2082 = vpop.f32.mrf.mxu0
    %2083 = vdwg.mxu0
    %v2084 = vmax.f32 %v2038, 0.0
    %v2085 = vpack.c.bf16 %v2084, %v2084
    %v2086 = vld [vmem:[%s7] sm:$0xf]
    %v2087 = vld [vmem:[%s7 + $0x4] sm:$0xf]
    %v2088 = vld [vmem:[%s7 + $0x8] sm:$0xf]
    %v2089 = vld [vmem:[%s7 + $0xc] sm:$0xf]
    %v2090 = vld [vmem:[%s7 + $0x10] sm:$0xf]
    %v2091 = vld [vmem:[%s7 + $0x14] sm:$0xf]
    %v2092 = vld [vmem:[%s7 + $0x18] sm:$0xf]
    %v2093 = vld [vmem:[%s7 + $0x1c] sm:$0xf]
    %v2094 = vld [vmem:[%s8] sm:$0x1]
    %v2096 = vlaneseq
    %v2097 = vshrl.u32 %v2096, 7
    %v2098 = vsub.s32 0, %v2097
    %v2099 = vrot.slane %v2094, %v2098
    %v2109 = vunpack.c.l.b16 %v2086
    %v2110 = vunpack.c.l.b16 %v2087
    %v2111 = vunpack.c.l.b16 %v2088
    %v2112 = vunpack.c.l.b16 %v2089
    %v2113 = vunpack.c.l.b16 %v2090
    %v2114 = vunpack.c.l.b16 %v2091
    %v2115 = vunpack.c.l.b16 %v2092
    %v2116 = vunpack.c.l.b16 %v2093
    %v2117 = vpack.c.b16 %v2110, %v2109
    %v2118 = vpack.c.b16 %v2112, %v2111
    %v2119 = vpack.c.b16 %v2114, %v2113
    %v2120 = vpack.c.b16 %v2116, %v2115
    %v2126 = vsel %vm399, %v2085, 0
    %2128 = vmatprep.subr.bf16.mxu0 0
    %2129 = vmatpush1.bf16.msra.mxu0 0
    %2130 = vmatprep.subr.bf16.mxu0 0
    %2131 = vmatpush1.bf16.msra.mxu0 0
    %2132 = vmatprep.subr.bf16.mxu0 0
    %2133 = vmatpush1.bf16.msra.mxu0 0
    %2134 = vmatprep.subr.bf16.mxu0 0
    %2135 = vmatpush1.bf16.msra.mxu0 0
    %2136 = vmatprep.subr.bf16.mxu0 0
    %2137 = vmatpush1.bf16.msra.mxu0 %v2120
    %2138 = vmatprep.subr.bf16.mxu0 0
    %2139 = vmatpush1.bf16.msra.mxu0 %v2119
    %2140 = vmatprep.subr.bf16.mxu0 0
    %2141 = vmatpush1.bf16.msra.mxu0 %v2118
    %2142 = vmatprep.subr.bf16.mxu0 0
    %2143 = vmatpush1.bf16.msra.mxu0 %v2117
    %2144 = vmatprep.subr.bf16.mxu0 0
    %2145 = vmatpush2.bf16.msra.mxu0 0
    %2146 = vmatprep.subr.bf16.mxu0 0
    %2147 = vmatpush2.bf16.msra.mxu0 0
    %2148 = vmatprep.subr.bf16.mxu0 0
    %2149 = vmatpush2.bf16.msra.mxu0 0
    %2150 = vmatprep.subr.bf16.mxu0 0
    %2151 = vmatpush2.bf16.msra.mxu0 0
    %2152 = vmatprep.subr.bf16.mxu0 0
    %2153 = vmatpush2.bf16.msra.mxu0 0
    %2154 = vmatprep.subr.bf16.mxu0 0
    %2155 = vmatpush2.bf16.msra.mxu0 0
    %2156 = vmatprep.subr.bf16.mxu0 0
    %2157 = vmatpush2.bf16.msra.mxu0 0
    %2158 = vmatprep.subr.bf16.mxu0 0
    %2159 = vmatpush2.bf16.msra.mxu0 0
    %2160 = vmatprep.mubr.bf16.mxu0 0
    %2161 = vmatmul.mubr.bf16.gmra.mxu0 %v2126
    %v2162 = vpop.f32.mrf.mxu0
    %v2163 = vadd.f32 %v2099, %v2162
    %v2164 = vpop.f32.mrf.mxu0
    %v2165 = vpop.f32.mrf.mxu0
    %v2166 = vpop.f32.mrf.mxu0
    %2167 = vdwg.mxu0
    %2168 = vst [vmem:[#allocation2] sm:$0x3] %v2163
    %vm2169 = vcmask 1041408
    %v2170 = vsel %vm2169, %v2040, -inf
    %v2171 = vsel %vm2169, %v2079, -inf
    %v2172 = vmax.f32 %v2170, %v2171
    %2173 = vmax.xlane.f32.xlu0 %v2172
    %v2174 = vpop.xlane.xlu0 %2173
    %v2175 = vsub.f32 %v2040, %v2174
    %v2176 = vsub.f32 %v2079, %v2174
    %v2177 = vmul.f32 %v2175, 1.442695
    %v2178 = vpow.pop %v2177
    %v2179 = vmul.f32 %v2176, 1.442695
    %v2180 = vpow.pop %v2179
    %v2181 = vld [vmem:[%s9] sm:$0xff]
    %v2182 = vld [vmem:[%s9 + $0x8] sm:$0xff]
    %v2183 = vld [vmem:[%s9 + $0x10] sm:$0xff]
    %v2184 = vld [vmem:[%s9 + $0x18] sm:$0xff]
    %v2185 = vld [vmem:[%s9 + $0x20] sm:$0xff]
    %v2186 = vld [vmem:[%s9 + $0x28] sm:$0xff]
    %v2187 = vld [vmem:[%s9 + $0x30] sm:$0xff]
    %v2188 = vld [vmem:[%s9 + $0x38] sm:$0xff]
    %v2189 = vld [vmem:[%s9 + $0x40] sm:$0xff]
    %v2190 = vld [vmem:[%s9 + $0x48] sm:$0xff]
    %v2191 = vld [vmem:[%s9 + $0x50] sm:$0xff]
    %v2192 = vld [vmem:[%s9 + $0x58] sm:$0xff]
    %v2193 = vld [vmem:[%s9 + $0x60] sm:$0xff]
    %v2194 = vld [vmem:[%s9 + $0x68] sm:$0xff]
    %v2195 = vld [vmem:[%s9 + $0x70] sm:$0xff]
    %v2196 = vld [vmem:[%s9 + $0x78] sm:$0xff]
    %v2197 = vld [vmem:[%s9 + $0x80] sm:$0xff]
    %v2198 = vld [vmem:[%s9 + $0x88] sm:$0xff]
    %v2199 = vld [vmem:[%s9 + $0x90] sm:$0xff]
    %v2200 = vld [vmem:[%s9 + $0x98] sm:$0xff]
    %v2201 = vld [vmem:[%s9 + $0xa0] sm:$0xff]
    %v2202 = vld [vmem:[%s9 + $0xa8] sm:$0xff]
    %v2203 = vld [vmem:[%s9 + $0xb0] sm:$0xff]
    %v2204 = vld [vmem:[%s9 + $0xb8] sm:$0xff]
    %v2205 = vld [vmem:[%s9 + $0xc0] sm:$0xff]
    %v2206 = vld [vmem:[%s9 + $0xc8] sm:$0xff]
    %v2207 = vld [vmem:[%s9 + $0xd0] sm:$0xff]
    %v2208 = vld [vmem:[%s9 + $0xd8] sm:$0xff]
    %v2209 = vld [vmem:[%s9 + $0xe0] sm:$0xff]
    %v2210 = vld [vmem:[%s9 + $0xe8] sm:$0xff]
    %v2211 = vld [vmem:[%s9 + $0xf0] sm:$0xff]
    %v2212 = vld [vmem:[%s9 + $0xf8] sm:$0xff]
    %2213 = vmatprep.subr.mxu0 0.0
    %2214 = vmatpush1.msra.mxu0 %v2196
    %2215 = vmatprep.subr.mxu0 0.0
    %2216 = vmatpush1.msra.mxu0 %v2195
    %2217 = vmatprep.subr.mxu0 0.0
    %2218 = vmatpush1.msra.mxu0 %v2194
    %2219 = vmatprep.subr.mxu0 0.0
    %2220 = vmatpush1.msra.mxu0 %v2193
    %2221 = vmatprep.subr.mxu0 0.0
    %2222 = vmatpush1.msra.mxu0 %v2192
    %2223 = vmatprep.subr.mxu0 0.0
    %2224 = vmatpush1.msra.mxu0 %v2191
    %2225 = vmatprep.subr.mxu0 0.0
    %2226 = vmatpush1.msra.mxu0 %v2190
    %2227 = vmatprep.subr.mxu0 0.0
    %2228 = vmatpush1.msra.mxu0 %v2189
    %2229 = vmatprep.subr.mxu0 0.0
    %2230 = vmatpush1.msra.mxu0 %v2188
    %2231 = vmatprep.subr.mxu0 0.0
    %2232 = vmatpush1.msra.mxu0 %v2187
    %2233 = vmatprep.subr.mxu0 0.0
    %2234 = vmatpush1.msra.mxu0 %v2186
    %2235 = vmatprep.subr.mxu0 0.0
    %2236 = vmatpush1.msra.mxu0 %v2185
    %2237 = vmatprep.subr.mxu0 0.0
    %2238 = vmatpush1.msra.mxu0 %v2184
    %2239 = vmatprep.subr.mxu0 0.0
    %2240 = vmatpush1.msra.mxu0 %v2183
    %2241 = vmatprep.subr.mxu0 0.0
    %2242 = vmatpush1.msra.mxu0 %v2182
    %2243 = vmatprep.subr.mxu0 0.0
    %2244 = vmatpush1.msra.mxu0 %v2181
    %2245 = vmatprep.subr.mxu0 0.0
    %2246 = vmatpush2.msra.mxu0 %v2212
    %2247 = vmatprep.subr.mxu0 0.0
    %2248 = vmatpush2.msra.mxu0 %v2211
    %2249 = vmatprep.subr.mxu0 0.0
    %2250 = vmatpush2.msra.mxu0 %v2210
    %2251 = vmatprep.subr.mxu0 0.0
    %2252 = vmatpush2.msra.mxu0 %v2209
    %2253 = vmatprep.subr.mxu0 0.0
    %2254 = vmatpush2.msra.mxu0 %v2208
    %2255 = vmatprep.subr.mxu0 0.0
    %2256 = vmatpush2.msra.mxu0 %v2207
    %2257 = vmatprep.subr.mxu0 0.0
    %2258 = vmatpush2.msra.mxu0 %v2206
    %2259 = vmatprep.subr.mxu0 0.0
    %2260 = vmatpush2.msra.mxu0 %v2205
    %2261 = vmatprep.subr.mxu0 0.0
    %2262 = vmatpush2.msra.mxu0 %v2204
    %2263 = vmatprep.subr.mxu0 0.0
    %2264 = vmatpush2.msra.mxu0 %v2203
    %2265 = vmatprep.subr.mxu0 0.0
    %2266 = vmatpush2.msra.mxu0 %v2202
    %2267 = vmatprep.subr.mxu0 0.0
    %2268 = vmatpush2.msra.mxu0 %v2201
    %2269 = vmatprep.subr.mxu0 0.0
    %2270 = vmatpush2.msra.mxu0 %v2200
    %2271 = vmatprep.subr.mxu0 0.0
    %2272 = vmatpush2.msra.mxu0 %v2199
    %2273 = vmatprep.subr.mxu0 0.0
    %2274 = vmatpush2.msra.mxu0 %v2198
    %2275 = vmatprep.subr.mxu0 0.0
    %2276 = vmatpush2.msra.mxu0 %v2197
    %2277 = vmatprep.mubr.f32.mxu0 %v2180
    %2278 = vmatmul.mubr.f32.gmra.mxu0 %v2178
    %v2279 = vpop.f32.mrf.mxu0
    %v2280 = vadd.f32 0.0, %v2279
    %v2281 = vpop.f32.mrf.mxu0
    %2282 = vdwg.mxu0
    %v2283 = vrcp.pop %v2280
    %v2284 = vmul.f32 1.0, %v2283
    %v2285 = vld [vmem:[%s10] sm:$0xff]
    %v2287 = vcombine.high %v2285, %v2285
    %vm2288 = vcmask 31744
    %v2290 = vsel %vm2288, %v2284, 0
    %vm2292 = vcmask 1043456
    %v2293 = vsel %vm2292, %v2285, 0
    %v2295 = vsel %vm2292, %v2287, 0
    %2297 = vmatprep.subr.mxu0 0.0
    %2298 = vmatpush1.msra.mxu0 0.0
    %2299 = vmatprep.subr.mxu0 0.0
    %2300 = vmatpush1.msra.mxu0 0.0
    %2301 = vmatprep.subr.mxu0 0.0
    %2302 = vmatpush1.msra.mxu0 0.0
    %2303 = vmatprep.subr.mxu0 0.0
    %2304 = vmatpush1.msra.mxu0 0.0
    %2305 = vmatprep.subr.mxu0 0.0
    %2306 = vmatpush1.msra.mxu0 0.0
    %2307 = vmatprep.subr.mxu0 0.0
    %2308 = vmatpush1.msra.mxu0 0.0
    %2309 = vmatprep.subr.mxu0 0.0
    %2310 = vmatpush1.msra.mxu0 0.0
    %2311 = vmatprep.subr.mxu0 0.0
    %2312 = vmatpush1.msra.mxu0 0.0
    %2313 = vmatprep.subr.mxu0 0.0
    %2314 = vmatpush1.msra.mxu0 0.0
    %2315 = vmatprep.subr.mxu0 0.0
    %2316 = vmatpush1.msra.mxu0 0.0
    %2317 = vmatprep.subr.mxu0 0.0
    %2318 = vmatpush1.msra.mxu0 0.0
    %2319 = vmatprep.subr.mxu0 0.0
    %2320 = vmatpush1.msra.mxu0 0.0
    %2321 = vmatprep.subr.mxu0 0.0
    %2322 = vmatpush1.msra.mxu0 0.0
    %2323 = vmatprep.subr.mxu0 0.0
    %2324 = vmatpush1.msra.mxu0 0.0
    %2325 = vmatprep.subr.mxu0 0.0
    %2326 = vmatpush1.msra.mxu0 0.0
    %2327 = vmatprep.subr.mxu0 %v2295
    %2328 = vmatpush1.msra.mxu0 %v2293
    %2329 = vmatprep.subr.mxu0 0.0
    %2330 = vmatpush2.msra.mxu0 0.0
    %2331 = vmatprep.subr.mxu0 0.0
    %2332 = vmatpush2.msra.mxu0 0.0
    %2333 = vmatprep.subr.mxu0 0.0
    %2334 = vmatpush2.msra.mxu0 0.0
    %2335 = vmatprep.subr.mxu0 0.0
    %2336 = vmatpush2.msra.mxu0 0.0
    %2337 = vmatprep.subr.mxu0 0.0
    %2338 = vmatpush2.msra.mxu0 0.0
    %2339 = vmatprep.subr.mxu0 0.0
    %2340 = vmatpush2.msra.mxu0 0.0
    %2341 = vmatprep.subr.mxu0 0.0
    %2342 = vmatpush2.msra.mxu0 0.0
    %2343 = vmatprep.subr.mxu0 0.0
    %2344 = vmatpush2.msra.mxu0 0.0
    %2345 = vmatprep.subr.mxu0 0.0
    %2346 = vmatpush2.msra.mxu0 0.0
    %2347 = vmatprep.subr.mxu0 0.0
    %2348 = vmatpush2.msra.mxu0 0.0
    %2349 = vmatprep.subr.mxu0 0.0
    %2350 = vmatpush2.msra.mxu0 0.0
    %2351 = vmatprep.subr.mxu0 0.0
    %2352 = vmatpush2.msra.mxu0 0.0
    %2353 = vmatprep.subr.mxu0 0.0
    %2354 = vmatpush2.msra.mxu0 0.0
    %2355 = vmatprep.subr.mxu0 0.0
    %2356 = vmatpush2.msra.mxu0 0.0
    %2357 = vmatprep.subr.mxu0 0.0
    %2358 = vmatpush2.msra.mxu0 0.0
    %2359 = vmatprep.subr.mxu0 0.0
    %2360 = vmatpush2.msra.mxu0 0.0
    %2361 = vmatprep.mubr.f32.mxu0 0.0
    %2362 = vmatmul.mubr.f32.gmra.mxu0 %v2290
    %v2363 = vpop.f32.mrf.mxu0
    %v2364 = vadd.f32 0.0, %v2363
    %v2365 = vpop.f32.mrf.mxu0
    %v2366 = vadd.f32 0.0, %v2365
    %2367 = vdwg.mxu0
    %v2368 = vmul.f32 %v2178, %v2364
    %v2369 = vmul.f32 %v2180, %v2366
    %v2372 = vcombine.low %v2368, %v2369
    %v2374 = vunpack.c.l.s4 1983009808
    %v2375 = vunpack.c.0.s8 %v2374
    %v2376 = vlaneseq
    %v2377 = vshrl.u32 %v2376, 7
    %v2378 = vsub.s32 %v2375, %v2377
    %v2379 = vrot.slane %v2372, %v2378
    %2381 = vst [vmem:[%s12] sm:$0xf] %v2379
    // Predicated region
    $region46: #{composite_forward.1} parent=1 // pred_check
      _
    $region47: #{composite_forward.1} parent=1 // pred_check_branch
      %2383 = sbr.rel (0) target = $region49
    $region48: #{composite_forward.1} parent=1 // pred_region
      %s2385 = ssub.s32 32, 32
      %2386 = vsyncadd [#allocation3], %s2385
      %s2388 = sshll.u32 [#allocation2], 4
      %s2389 = int_to_ptr.vmem [resolvable:$true] %s2388
      %2391 = dma.vmem_to_hbm [thread:$0]  %s2389, 32, %s11, [#allocation3]
    $region49: #{composite_forward.1} parent=1 // pred_fallthru
      _
    // Predicated region
    $region50: #{composite_forward.1} parent=1 // pred_check
      _
    $region51: #{composite_forward.1} parent=1 // pred_check_branch
      %2393 = sbr.rel (0) target = $region53
    $region52: #{composite_forward.1} parent=1 // pred_region
      _
    $region53: #{composite_forward.1} parent=1 // pred_fallthru
      _
    // Predicated region
    $region54: #{composite_forward.1} parent=1 // pred_check
      _
    $region55: #{composite_forward.1} parent=1 // pred_check_branch
      %2395 = sbr.rel (0) target = $region57
    $region56: #{composite_forward.1} parent=1 // pred_region
      %2396 = dma.done [#allocation3], 32
    $region57: #{composite_forward.1} parent=1 // pred_fallthru
      _
    // Predicated region
    $region58: #{composite_forward.1} parent=1 // pred_check
      _
    $region59: #{composite_forward.1} parent=1 // pred_check_branch
      %2398 = sbr.rel (0) target = $region61
    $region60: #{composite_forward.1} parent=1 // pred_region
      _
    $region61: #{composite_forward.1} parent=1 // pred_fallthru
      _
    %2399 = vsyncpa [#allocation3], 1

</llo_original>
